<compile_context>
chip_gen: v7x
topology: tpu7x:2x2x1
jax: 0.10.0
libtpu: 0.0.40
codegen_flags: <defaults>
</compile_context>

<pallas_src>
import math

import jax
import jax.numpy as jnp
from jax import lax
from jax.experimental import pallas as pl
from jax.experimental.pallas import tpu as pltpu

LANE = 128           # vreg lane width
SUBLANE = 8          # f32 sublane count
NEG_INF = -1e30      # finite "minus infinity" for padded vocab columns / max init

LSTM_CHUNK = 64      # time-steps per LSTM grid step (static unroll inside)
PROJ_ROW_BLOCK = 512 # max rows per projection row-block (grid axis 0, "parallel")
VOCAB_TILE = 512     # vocab tile width (multiple of 256 for v6e/v7x MXU)
VMEM_LIMIT = 48 * 1024 * 1024  # explicit scoped-VMEM cap (headroom under v7x 64 MiB)


def _round_up(n, m):
    return (n + m - 1) // m * m


def _sigmoid(x):
    # tanh-form sigmoid: a single EUP op on the serialized recurrence path
    # (vs exp + reciprocal if logistic lowers that way).
    return 0.5 * jnp.tanh(0.5 * x) + 0.5


# ---------------------------------------------------------------------------
# Kernel 1: LSTM recurrence over one time chunk; h/c carried in VMEM scratch.
# ---------------------------------------------------------------------------
def lstm_kernel(x_ref, wih_ref, whh_ref, b_ref, hs_ref, h_ref, c_ref):
    """x_ref: (RB, Ep); wih_ref: (Ep, 4Hp); whh_ref: (Hp, 4Hp); b_ref: (1, 4Hp);
    hs_ref (out, bf16/f32): (RB, Hp); h_ref/c_ref: (1, Hp) f32 scratch carry."""
    RB, Hp = hs_ref.shape

    @pl.when(pl.program_id(0) == 0)
    def _init():
        h_ref[...] = jnp.zeros_like(h_ref)
        c_ref[...] = jnp.zeros_like(c_ref)

    # Input contribution for every timestep of this chunk with the bias folded
    # in: one MXU matmul, removing one add + operand load from every step.
    xw = jnp.dot(x_ref[...], wih_ref[...],
                 preferred_element_type=jnp.float32) + b_ref[...]
    whh = whh_ref[...]
    h = h_ref[...]
    c = c_ref[...]

    # Static unroll over the chunk (RB is a compile-time constant): static row
    # slices of xw, and 8-row sublane-aligned stores of the hidden states.
    # TODO(synk): hold whh resident on the MXU (matmul_push_rhs/matmul_acc_lhs/
    # matmul_pop) instead of re-pushing the (Hp, 4Hp) RHS every timestep.
    for blk in range(RB // SUBLANE):
        rows = []
        for s in range(SUBLANE):
            t = blk * SUBLANE + s
            # (1, 4Hp) gate pre-activations.  Hp is a multiple of 128, so every
            # gate slice below is a full-vreg lane-aligned (free) slice.
            gates = xw[t:t + 1, :] + jnp.dot(
                h, whh, preferred_element_type=jnp.float32)
            i_g = _sigmoid(gates[:, 0 * Hp:1 * Hp])
            f_g = _sigmoid(gates[:, 1 * Hp:2 * Hp])
            g_g = jnp.tanh(gates[:, 2 * Hp:3 * Hp])
            o_g = _sigmoid(gates[:, 3 * Hp:4 * Hp])
            c = f_g * c + i_g * g_g
            h = o_g * jnp.tanh(c)
            rows.append(h)
        hs_ref[blk * SUBLANE:(blk + 1) * SUBLANE, :] = (
            jnp.concatenate(rows, 0).astype(hs_ref.dtype))

    h_ref[...] = h
    c_ref[...] = c


# ---------------------------------------------------------------------------
# Kernel 2: hidden2vocab projection + online log-softmax statistics.
# Grid = (row_block "parallel", vocab_tile "arbitrary").  Writes the
# un-normalized logits (consumed by kernel 3) and, at the last vocab tile,
# the per-row logsumexp.  The weight is streamed exactly once per row block.
# ---------------------------------------------------------------------------
def proj_stats_kernel(hs_ref, w_ref, b_ref, logits_ref, lse_ref, m_ref, l_ref):
    j = pl.program_id(1)

    @pl.when(j == 0)
    def _init():
        m_ref[...] = jnp.full_like(m_ref, NEG_INF)
        l_ref[...] = jnp.zeros_like(l_ref)

    # bf16 x bf16 MXU matmul, f32 accumulation; bias stays f32.
    logits = jnp.dot(hs_ref[...], w_ref[...],
                     preferred_element_type=jnp.float32) + b_ref[...]
    logits_ref[...] = logits

    m_old = m_ref[...]
    m_new = jnp.maximum(m_old, jnp.max(logits, axis=-1, keepdims=True))
    l_ref[...] = (l_ref[...] * jnp.exp(m_old - m_new)
                  + jnp.sum(jnp.exp(logits - m_new), axis=-1, keepdims=True))
    m_ref[...] = m_new

    @pl.when(j == pl.num_programs(1) - 1)
    def _finish():
        lse_ref[...] = m_ref[...] + jnp.log(l_ref[...])


# ---------------------------------------------------------------------------
# Kernel 3: normalize the already-written logits: out = logits - logsumexp.
# ---------------------------------------------------------------------------
def lsm_normalize_kernel(logits_ref, lse_ref, out_ref):
    out_ref[...] = logits_ref[...] - lse_ref[...]


# ---------------------------------------------------------------------------
# Parameter setup (one-time), forward wrapper, and pure-JAX reference.
# ---------------------------------------------------------------------------
def init_params(key, embedding_dim, hidden_dim, vocab_size):
    """Deterministic synthetic parameters matching the PyTorch module's shapes."""
    ks = jax.random.split(key, 7)
    k = 1.0 / math.sqrt(hidden_dim)
    emb = jax.random.normal(ks[0], (vocab_size, embedding_dim), jnp.float32)
    w_ih = jax.random.uniform(ks[1], (4 * hidden_dim, embedding_dim),
                              jnp.float32, -k, k)
    w_hh = jax.random.uniform(ks[2], (4 * hidden_dim, hidden_dim),
                              jnp.float32, -k, k)
    b_ih = jax.random.uniform(ks[3], (4 * hidden_dim,), jnp.float32, -k, k)
    b_hh = jax.random.uniform(ks[4], (4 * hidden_dim,), jnp.float32, -k, k)
    w_out = jax.random.uniform(ks[5], (vocab_size, hidden_dim),
                               jnp.float32, -k, k)
    b_out = jax.random.uniform(ks[6], (vocab_size,), jnp.float32, -k, k)
    return dict(emb=emb, w_ih=w_ih, w_hh=w_hh, b_ih=b_ih, b_hh=b_hh,
                w_out=w_out, b_out=b_out)


def prepare_params(params, hidden_dim, proj_weight_dtype=jnp.bfloat16,
                   vocab_tile=VOCAB_TILE):
    """One-time transpose + padding of the weights into the kernel layout.

    - H / E are padded to lane multiples; V is padded to a multiple of the
      vocab tile, so gate splits, hidden-state stores and the output are all
      unmasked full-vreg accesses.
    - Padded hidden units get zero weights/bias => their h/c stay exactly 0.
    - Padded vocab columns get zero weight and a -1e30 bias => they vanish
      under log_softmax and are sliced off in the wrapper.
    - proj_weight_dtype=bf16 halves HBM traffic of the dominant vocab-projection
      weight stream (native MXU dtype; f32 accumulation kept).
    """
    H = hidden_dim
    V, E = params["w_out"].shape[0], params["emb"].shape[1]
    Hp = _round_up(H, LANE)
    Ep = _round_up(E, LANE)
    Vp = _round_up(V, vocab_tile)

    def pad_gate_cols(w):  # (rows, 4H) -> (rows, 4Hp), gate blocks kept aligned
        blocks = [w[:, g * H:(g + 1) * H] for g in range(4)]
        blocks = [jnp.pad(b, ((0, 0), (0, Hp - H))) for b in blocks]
        return jnp.concatenate(blocks, axis=1)

    wih = jnp.pad(pad_gate_cols(params["w_ih"].T), ((0, Ep - E), (0, 0)))
    whh = jnp.pad(pad_gate_cols(params["w_hh"].T), ((0, Hp - H), (0, 0)))
    bias = pad_gate_cols((params["b_ih"] + params["b_hh"]).reshape(1, 4 * H))
    wout = jnp.pad(params["w_out"].T,
                   ((0, Hp - H), (0, Vp - V))).astype(proj_weight_dtype)
    bout = jnp.pad(params["b_out"].reshape(1, V), ((0, 0), (0, Vp - V)),
                   constant_values=NEG_INF)
    emb = jnp.pad(params["emb"], ((0, 0), (0, Ep - E)))
    return dict(emb=emb, wih=wih, whh=whh, bias=bias, wout=wout, bout=bout,
                H=H, Hp=Hp, E=E, Ep=Ep, V=V, Vp=Vp,
                TV=vocab_tile, proj_dtype=proj_weight_dtype)


def basic_lm_forward(document, econ_data, prep):
    """Pallas-backed forward of BasicLM. `econ_data` is unused (as in PyTorch)."""
    del econ_data  # not consumed by BasicLM.forward
    T = document.shape[0]
    Hp, Ep = prep["Hp"], prep["Ep"]
    V, Vp, TV = prep["V"], prep["Vp"], prep["TV"]
    proj_dtype = prep["proj_dtype"]
    wbytes = prep["wout"].dtype.itemsize
    hbytes = jnp.dtype(proj_dtype).itemsize

    # Time padding: RB = LSTM time-chunk, TR = projection row block (multiple
    # of RB), Tp = padded sequence length (multiple of TR, hence of RB).
    RB = min(LSTM_CHUNK, _round_up(T, SUBLANE))
    TR = min(PROJ_ROW_BLOCK, _round_up(T, RB))
    Tp = _round_up(T, TR)
    nr, nv = Tp // TR, Vp // TV

    # Glue: embedding gather in plain JAX; pad T up to the padded length.
    x = jnp.take(prep["emb"], document, axis=0)
    x = jnp.pad(x, ((0, Tp - T), (0, 0)))

    # ---- LSTM recurrence, chunked over time (h/c carried in VMEM scratch) ----
    hs = pl.pallas_call(
        lstm_kernel,
        out_shape=jax.ShapeDtypeStruct((Tp, Hp), proj_dtype),
        grid_spec=pltpu.PrefetchScalarGridSpec(
            num_scalar_prefetch=0,
            grid=(Tp // RB,),
            in_specs=[
                pl.BlockSpec((RB, Ep), lambda t: (t, 0)),        # x chunk
                pl.BlockSpec((Ep, 4 * Hp), lambda t: (0, 0)),    # wih (resident)
                pl.BlockSpec((Hp, 4 * Hp), lambda t: (0, 0)),    # whh (resident)
                pl.BlockSpec((1, 4 * Hp), lambda t: (0, 0)),     # bias (resident)
            ],
            out_specs=pl.BlockSpec((RB, Hp), lambda t: (t, 0)),
            scratch_shapes=[pltpu.VMEM((1, Hp), jnp.float32),    # h carry
                            pltpu.VMEM((1, Hp), jnp.float32)],   # c carry
        ),
        compiler_params=pltpu.CompilerParams(
            dimension_semantics=("arbitrary",),     # serial carry across chunks
            vmem_limit_bytes=VMEM_LIMIT,
        ),
        cost_estimate=pl.CostEstimate(
            flops=2 * Tp * Ep * 4 * Hp + 2 * Tp * Hp * 4 * Hp + 10 * Tp * Hp,
            transcendentals=5 * Tp * Hp,
            bytes_accessed=(Tp * Ep + Ep * 4 * Hp + Hp * 4 * Hp + 4 * Hp) * 4
                           + Tp * Hp * hbytes,
        ),
    )(x, prep["wih"], prep["whh"], prep["bias"])

    # ---- hidden2vocab projection + online log-softmax stats (single weight
    #      stream per row block, bf16 weights/hs, TV-wide vocab tiles) ----
    logits, lse = pl.pallas_call(
        proj_stats_kernel,
        out_shape=(jax.ShapeDtypeStruct((Tp, Vp), jnp.float32),
                   jax.ShapeDtypeStruct((Tp, 1), jnp.float32)),
        grid_spec=pltpu.PrefetchScalarGridSpec(
            num_scalar_prefetch=0,
            grid=(nr, nv),                                        # (row blk, vtile)
            in_specs=[
                pl.BlockSpec((TR, Hp), lambda r, j: (r, 0)),      # hs row block
                pl.BlockSpec((Hp, TV), lambda r, j: (0, j)),      # wout tile
                pl.BlockSpec((1, TV), lambda r, j: (0, j)),       # bout tile
            ],
            out_specs=[pl.BlockSpec((TR, TV), lambda r, j: (r, j)),   # logits
                       pl.BlockSpec((TR, 1), lambda r, j: (r, 0))],   # logsumexp
            scratch_shapes=[pltpu.VMEM((TR, 1), jnp.float32),     # running max
                            pltpu.VMEM((TR, 1), jnp.float32)],    # running sum-exp
        ),
        compiler_params=pltpu.CompilerParams(
            # Row blocks are independent (megacore on v7x); the vocab axis must
            # stay "arbitrary" so the m/l accumulation order is preserved.
            dimension_semantics=("parallel", "arbitrary"),
            vmem_limit_bytes=VMEM_LIMIT,
        ),
        cost_estimate=pl.CostEstimate(
            flops=2 * Tp * Hp * Vp,
            transcendentals=Tp * Vp,
            bytes_accessed=(nr * Hp * Vp) * wbytes + Tp * Hp * hbytes
                           + (Tp * Vp + Vp + Tp) * 4,
        ),
    )(hs, prep["wout"], prep["bout"])

    # ---- normalize: log-probabilities = logits - logsumexp ----
    scores_p = pl.pallas_call(
        lsm_normalize_kernel,
        out_shape=jax.ShapeDtypeStruct((Tp, Vp), jnp.float32),
        grid_spec=pltpu.PrefetchScalarGridSpec(
            num_scalar_prefetch=0,
            grid=(nr, nv),
            in_specs=[
                pl.BlockSpec((TR, TV), lambda r, j: (r, j)),
                pl.BlockSpec((TR, 1), lambda r, j: (r, 0)),
            ],
            out_specs=pl.BlockSpec((TR, TV), lambda r, j: (r, j)),
        ),
        compiler_params=pltpu.CompilerParams(
            dimension_semantics=("parallel", "parallel"),
            vmem_limit_bytes=VMEM_LIMIT,
        ),
        cost_estimate=pl.CostEstimate(
            flops=Tp * Vp, transcendentals=0,
            bytes_accessed=2 * Tp * Vp * 4 + Tp * 4,
        ),
    )(logits, lse)

    return scores_p[:T, :V]


def basic_lm_reference(document, params, hidden_dim,
                       proj_weight_dtype=jnp.bfloat16):
    """Pure-JAX reference mirroring the kernel's numerics (bf16 projection)."""
    x = jnp.take(params["emb"], document, axis=0).astype(jnp.float32)
    H = hidden_dim
    w_ih, w_hh = params["w_ih"], params["w_hh"]
    b = params["b_ih"] + params["b_hh"]

    def step(carry, xt):
        h, c = carry
        gates = xt @ w_ih.T + h @ w_hh.T + b
        i = jax.nn.sigmoid(gates[0 * H:1 * H])
        f = jax.nn.sigmoid(gates[1 * H:2 * H])
        g = jnp.tanh(gates[2 * H:3 * H])
        o = jax.nn.sigmoid(gates[3 * H:4 * H])
        c_new = f * c + i * g
        h_new = o * jnp.tanh(c_new)
        return (h_new, c_new), h_new

    h0 = jnp.zeros((H,), jnp.float32)
    _, hs = lax.scan(step, (h0, h0), x)
    logits = jnp.dot(hs.astype(proj_weight_dtype),
                     params["w_out"].T.astype(proj_weight_dtype),
                     preferred_element_type=jnp.float32) + params["b_out"]
    return jax.nn.log_softmax(logits, axis=1)


if __name__ == "__main__":
    embedding_dim = 32
    hidden_dim = 32
    vocab_size = 1000   # pads to 1024 -> 2 vocab tiles of 512 (exercises online stats)
    seq_len = 8

    key = jax.random.PRNGKey(0)
    k_doc, k_econ, k_params = jax.random.split(key, 3)

    document = jax.random.randint(k_doc, (seq_len,), 0, vocab_size, jnp.int32)
    econ_data = jax.random.normal(k_econ, (seq_len, 4), jnp.float32)  # unused by BasicLM
    params = init_params(k_params, embedding_dim, hidden_dim, vocab_size)
    prep = prepare_params(params, hidden_dim)   # one-time layout/pad/bf16 step

    scores = basic_lm_forward(document, econ_data, prep)
    scores = jax.block_until_ready(scores)

    ref = basic_lm_reference(document, params, hidden_dim)
    assert scores.shape == (seq_len, vocab_size)
    max_err = float(jnp.max(jnp.abs(scores - ref)))
    assert jnp.allclose(scores, ref, atol=5e-3, rtol=5e-3), (
        f"mismatch vs JAX reference (max abs err {max_err})")

    print("KERNEL_OK")
</pallas_src>

<mosaic_0001>
module attributes {stable_mosaic.version = 11 : i64} {
  func.func @lstm_kernel(%arg0: i32, %arg1: memref<8x128xf32, #tpu.memory_space<vmem>>, %arg2: memref<128x512xf32, #tpu.memory_space<vmem>>, %arg3: memref<128x512xf32, #tpu.memory_space<vmem>>, %arg4: memref<1x512xf32, #tpu.memory_space<vmem>>, %arg5: memref<8x128xbf16, #tpu.memory_space<vmem>>, %arg6: memref<1x128xf32, #tpu.memory_space<vmem>>, %arg7: memref<1x128xf32, #tpu.memory_space<vmem>>) attributes {dimension_semantics = [#tpu.dimension_semantics<arbitrary>], iteration_bounds = array<i64: 1>, scalar_prefetch = 0 : i64, scratch_operands = 2 : i64, tpu.core_type = #tpu.core_type<tc>, window_params = [{transform_indices = @transform_0, window_bounds = array<i64: 8, 128>}, {pipeline_mode = #tpu.pipeline_mode<synchronous>, transform_indices = @transform_1, window_bounds = array<i64: 128, 512>}, {pipeline_mode = #tpu.pipeline_mode<synchronous>, transform_indices = @transform_2, window_bounds = array<i64: 128, 512>}, {pipeline_mode = #tpu.pipeline_mode<synchronous>, transform_indices = @transform_3, window_bounds = array<i64: 1, 512>}, {transform_indices = @transform_4, window_bounds = array<i64: 8, 128>}]} {
    %c0_i32 = arith.constant 0 : i32
    %0 = arith.cmpi eq, %arg0, %c0_i32 : i32
    %1 = arith.extui %0 : i1 to i32
    %c0_i32_0 = arith.constant 0 : i32
    %2 = arith.cmpi ne, %1, %c0_i32_0 : i32
    scf.if %2 {
      %cst_98 = arith.constant 0.000000e+00 : f32
      %289 = vector.broadcast %cst_98 : f32 to vector<1x128xf32>
      %c0_99 = arith.constant 0 : index
      %c0_100 = arith.constant 0 : index
      %290 = vector.load %arg6[%c0_99, %c0_100] : memref<1x128xf32, #tpu.memory_space<vmem>>, vector<1x128xf32>
      tpu.vector_store %arg6[%c0_99, %c0_100], %289 {strides = array<i32>} : memref<1x128xf32, #tpu.memory_space<vmem>>, vector<1x128xf32>,
      %cst_101 = arith.constant 0.000000e+00 : f32
      %291 = vector.broadcast %cst_101 : f32 to vector<1x128xf32>
      %c0_102 = arith.constant 0 : index
      %c0_103 = arith.constant 0 : index
      %292 = vector.load %arg7[%c0_102, %c0_103] : memref<1x128xf32, #tpu.memory_space<vmem>>, vector<1x128xf32>
      tpu.vector_store %arg7[%c0_102, %c0_103], %291 {strides = array<i32>} : memref<1x128xf32, #tpu.memory_space<vmem>>, vector<1x128xf32>,
    } else {
    }
    %c0 = arith.constant 0 : index
    %c0_1 = arith.constant 0 : index
    %3 = vector.load %arg1[%c0, %c0_1] : memref<8x128xf32, #tpu.memory_space<vmem>>, vector<8x128xf32>
    %c0_2 = arith.constant 0 : index
    %c0_3 = arith.constant 0 : index
    %4 = vector.load %arg2[%c0_2, %c0_3] : memref<128x512xf32, #tpu.memory_space<vmem>>, vector<128x512xf32>
    %cst = arith.constant dense<0.000000e+00> : vector<8x512xf32>
    %5 = tpu.matmul %3, %4, %cst {dimension_numbers = #tpu.dot_dimension_numbers<[1], [0], [0], [1], [0, 0, 1, 1], [], []>} : vector<8x128xf32>, vector<128x512xf32>, vector<8x512xf32> -> vector<8x512xf32>
    %c0_4 = arith.constant 0 : index
    %c0_5 = arith.constant 0 : index
    %6 = vector.load %arg4[%c0_4, %c0_5] : memref<1x512xf32, #tpu.memory_space<vmem>>, vector<1x512xf32>
    %7 = vector.broadcast %6 : vector<1x512xf32> to vector<8x512xf32>
    %8 = arith.addf %5, %7 : vector<8x512xf32>
    %c0_6 = arith.constant 0 : index
    %c0_7 = arith.constant 0 : index
    %9 = vector.load %arg3[%c0_6, %c0_7] : memref<128x512xf32, #tpu.memory_space<vmem>>, vector<128x512xf32>
    %c0_8 = arith.constant 0 : index
    %c0_9 = arith.constant 0 : index
    %10 = vector.load %arg6[%c0_8, %c0_9] : memref<1x128xf32, #tpu.memory_space<vmem>>, vector<1x128xf32>
    %c0_10 = arith.constant 0 : index
    %c0_11 = arith.constant 0 : index
    %11 = vector.load %arg7[%c0_10, %c0_11] : memref<1x128xf32, #tpu.memory_space<vmem>>, vector<1x128xf32>
    %12 = vector.extract_strided_slice %8 {offsets = [0, 0], sizes = [1, 512], strides = [1, 1]} : vector<8x512xf32> to vector<1x512xf32>
    %cst_12 = arith.constant dense<0.000000e+00> : vector<1x512xf32>
    %13 = tpu.matmul %10, %9, %cst_12 {dimension_numbers = #tpu.dot_dimension_numbers<[1], [0], [0], [1], [0, 0, 1, 1], [], []>} : vector<1x128xf32>, vector<128x512xf32>, vector<1x512xf32> -> vector<1x512xf32>
    %14 = arith.addf %12, %13 : vector<1x512xf32>
    %15 = vector.extract_strided_slice %14 {offsets = [0, 0], sizes = [1, 128], strides = [1, 1]} : vector<1x512xf32> to vector<1x128xf32>
    %cst_13 = arith.constant 5.000000e-01 : f32
    %16 = vector.broadcast %cst_13 : f32 to vector<1x128xf32>
    %17 = arith.mulf %16, %15 : vector<1x128xf32>
    %18 = math.tanh %17 : vector<1x128xf32>
    %cst_14 = arith.constant 5.000000e-01 : f32
    %19 = vector.broadcast %cst_14 : f32 to vector<1x128xf32>
    %20 = arith.mulf %19, %18 : vector<1x128xf32>
    %cst_15 = arith.constant 5.000000e-01 : f32
    %21 = vector.broadcast %cst_15 : f32 to vector<1x128xf32>
    %22 = arith.addf %20, %21 : vector<1x128xf32>
    %23 = vector.extract_strided_slice %14 {offsets = [0, 128], sizes = [1, 128], strides = [1, 1]} : vector<1x512xf32> to vector<1x128xf32>
    %cst_16 = arith.constant 5.000000e-01 : f32
    %24 = vector.broadcast %cst_16 : f32 to vector<1x128xf32>
    %25 = arith.mulf %24, %23 : vector<1x128xf32>
    %26 = math.tanh %25 : vector<1x128xf32>
    %cst_17 = arith.constant 5.000000e-01 : f32
    %27 = vector.broadcast %cst_17 : f32 to vector<1x128xf32>
    %28 = arith.mulf %27, %26 : vector<1x128xf32>
    %cst_18 = arith.constant 5.000000e-01 : f32
    %29 = vector.broadcast %cst_18 : f32 to vector<1x128xf32>
    %30 = arith.addf %28, %29 : vector<1x128xf32>
    %31 = vector.extract_strided_slice %14 {offsets = [0, 256], sizes = [1, 128], strides = [1, 1]} : vector<1x512xf32> to vector<1x128xf32>
    %32 = math.tanh %31 : vector<1x128xf32>
    %33 = vector.extract_strided_slice %14 {offsets = [0, 384], sizes = [1, 128], strides = [1, 1]} : vector<1x512xf32> to vector<1x128xf32>
    %cst_19 = arith.constant 5.000000e-01 : f32
    %34 = vector.broadcast %cst_19 : f32 to vector<1x128xf32>
    %35 = arith.mulf %34, %33 : vector<1x128xf32>
    %36 = math.tanh %35 : vector<1x128xf32>
    %cst_20 = arith.constant 5.000000e-01 : f32
    %37 = vector.broadcast %cst_20 : f32 to vector<1x128xf32>
    %38 = arith.mulf %37, %36 : vector<1x128xf32>
    %cst_21 = arith.constant 5.000000e-01 : f32
    %39 = vector.broadcast %cst_21 : f32 to vector<1x128xf32>
    %40 = arith.addf %38, %39 : vector<1x128xf32>
    %41 = arith.mulf %30, %11 : vector<1x128xf32>
    %42 = arith.mulf %22, %32 : vector<1x128xf32>
    %43 = arith.addf %41, %42 : vector<1x128xf32>
    %44 = math.tanh %43 : vector<1x128xf32>
    %45 = arith.mulf %40, %44 : vector<1x128xf32>
    %46 = vector.extract_strided_slice %8 {offsets = [1, 0], sizes = [1, 512], strides = [1, 1]} : vector<8x512xf32> to vector<1x512xf32>
    %cst_22 = arith.constant dense<0.000000e+00> : vector<1x512xf32>
    %47 = tpu.matmul %45, %9, %cst_22 {dimension_numbers = #tpu.dot_dimension_numbers<[1], [0], [0], [1], [0, 0, 1, 1], [], []>} : vector<1x128xf32>, vector<128x512xf32>, vector<1x512xf32> -> vector<1x512xf32>
    %48 = arith.addf %46, %47 : vector<1x512xf32>
    %49 = vector.extract_strided_slice %48 {offsets = [0, 0], sizes = [1, 128], strides = [1, 1]} : vector<1x512xf32> to vector<1x128xf32>
    %cst_23 = arith.constant 5.000000e-01 : f32
    %50 = vector.broadcast %cst_23 : f32 to vector<1x128xf32>
    %51 = arith.mulf %50, %49 : vector<1x128xf32>
    %52 = math.tanh %51 : vector<1x128xf32>
    %cst_24 = arith.constant 5.000000e-01 : f32
    %53 = vector.broadcast %cst_24 : f32 to vector<1x128xf32>
    %54 = arith.mulf %53, %52 : vector<1x128xf32>
    %cst_25 = arith.constant 5.000000e-01 : f32
    %55 = vector.broadcast %cst_25 : f32 to vector<1x128xf32>
    %56 = arith.addf %54, %55 : vector<1x128xf32>
    %57 = vector.extract_strided_slice %48 {offsets = [0, 128], sizes = [1, 128], strides = [1, 1]} : vector<1x512xf32> to vector<1x128xf32>
    %cst_26 = arith.constant 5.000000e-01 : f32
    %58 = vector.broadcast %cst_26 : f32 to vector<1x128xf32>
    %59 = arith.mulf %58, %57 : vector<1x128xf32>
    %60 = math.tanh %59 : vector<1x128xf32>
    %cst_27 = arith.constant 5.000000e-01 : f32
    %61 = vector.broadcast %cst_27 : f32 to vector<1x128xf32>
    %62 = arith.mulf %61, %60 : vector<1x128xf32>
    %cst_28 = arith.constant 5.000000e-01 : f32
    %63 = vector.broadcast %cst_28 : f32 to vector<1x128xf32>
    %64 = arith.addf %62, %63 : vector<1x128xf32>
    %65 = vector.extract_strided_slice %48 {offsets = [0, 256], sizes = [1, 128], strides = [1, 1]} : vector<1x512xf32> to vector<1x128xf32>
    %66 = math.tanh %65 : vector<1x128xf32>
    %67 = vector.extract_strided_slice %48 {offsets = [0, 384], sizes = [1, 128], strides = [1, 1]} : vector<1x512xf32> to vector<1x128xf32>
    %cst_29 = arith.constant 5.000000e-01 : f32
    %68 = vector.broadcast %cst_29 : f32 to vector<1x128xf32>
    %69 = arith.mulf %68, %67 : vector<1x128xf32>
    %70 = math.tanh %69 : vector<1x128xf32>
    %cst_30 = arith.constant 5.000000e-01 : f32
    %71 = vector.broadcast %cst_30 : f32 to vector<1x128xf32>
    %72 = arith.mulf %71, %70 : vector<1x128xf32>
    %cst_31 = arith.constant 5.000000e-01 : f32
    %73 = vector.broadcast %cst_31 : f32 to vector<1x128xf32>
    %74 = arith.addf %72, %73 : vector<1x128xf32>
    %75 = arith.mulf %64, %43 : vector<1x128xf32>
    %76 = arith.mulf %56, %66 : vector<1x128xf32>
    %77 = arith.addf %75, %76 : vector<1x128xf32>
    %78 = math.tanh %77 : vector<1x128xf32>
    %79 = arith.mulf %74, %78 : vector<1x128xf32>
    %80 = vector.extract_strided_slice %8 {offsets = [2, 0], sizes = [1, 512], strides = [1, 1]} : vector<8x512xf32> to vector<1x512xf32>
    %cst_32 = arith.constant dense<0.000000e+00> : vector<1x512xf32>
    %81 = tpu.matmul %79, %9, %cst_32 {dimension_numbers = #tpu.dot_dimension_numbers<[1], [0], [0], [1], [0, 0, 1, 1], [], []>} : vector<1x128xf32>, vector<128x512xf32>, vector<1x512xf32> -> vector<1x512xf32>
    %82 = arith.addf %80, %81 : vector<1x512xf32>
    %83 = vector.extract_strided_slice %82 {offsets = [0, 0], sizes = [1, 128], strides = [1, 1]} : vector<1x512xf32> to vector<1x128xf32>
    %cst_33 = arith.constant 5.000000e-01 : f32
    %84 = vector.broadcast %cst_33 : f32 to vector<1x128xf32>
    %85 = arith.mulf %84, %83 : vector<1x128xf32>
    %86 = math.tanh %85 : vector<1x128xf32>
    %cst_34 = arith.constant 5.000000e-01 : f32
    %87 = vector.broadcast %cst_34 : f32 to vector<1x128xf32>
    %88 = arith.mulf %87, %86 : vector<1x128xf32>
    %cst_35 = arith.constant 5.000000e-01 : f32
    %89 = vector.broadcast %cst_35 : f32 to vector<1x128xf32>
    %90 = arith.addf %88, %89 : vector<1x128xf32>
    %91 = vector.extract_strided_slice %82 {offsets = [0, 128], sizes = [1, 128], strides = [1, 1]} : vector<1x512xf32> to vector<1x128xf32>
    %cst_36 = arith.constant 5.000000e-01 : f32
    %92 = vector.broadcast %cst_36 : f32 to vector<1x128xf32>
    %93 = arith.mulf %92, %91 : vector<1x128xf32>
    %94 = math.tanh %93 : vector<1x128xf32>
    %cst_37 = arith.constant 5.000000e-01 : f32
    %95 = vector.broadcast %cst_37 : f32 to vector<1x128xf32>
    %96 = arith.mulf %95, %94 : vector<1x128xf32>
    %cst_38 = arith.constant 5.000000e-01 : f32
    %97 = vector.broadcast %cst_38 : f32 to vector<1x128xf32>
    %98 = arith.addf %96, %97 : vector<1x128xf32>
    %99 = vector.extract_strided_slice %82 {offsets = [0, 256], sizes = [1, 128], strides = [1, 1]} : vector<1x512xf32> to vector<1x128xf32>
    %100 = math.tanh %99 : vector<1x128xf32>
    %101 = vector.extract_strided_slice %82 {offsets = [0, 384], sizes = [1, 128], strides = [1, 1]} : vector<1x512xf32> to vector<1x128xf32>
    %cst_39 = arith.constant 5.000000e-01 : f32
    %102 = vector.broadcast %cst_39 : f32 to vector<1x128xf32>
    %103 = arith.mulf %102, %101 : vector<1x128xf32>
    %104 = math.tanh %103 : vector<1x128xf32>
    %cst_40 = arith.constant 5.000000e-01 : f32
    %105 = vector.broadcast %cst_40 : f32 to vector<1x128xf32>
    %106 = arith.mulf %105, %104 : vector<1x128xf32>
    %cst_41 = arith.constant 5.000000e-01 : f32
    %107 = vector.broadcast %cst_41 : f32 to vector<1x128xf32>
    %108 = arith.addf %106, %107 : vector<1x128xf32>
    %109 = arith.mulf %98, %77 : vector<1x128xf32>
    %110 = arith.mulf %90, %100 : vector<1x128xf32>
    %111 = arith.addf %109, %110 : vector<1x128xf32>
    %112 = math.tanh %111 : vector<1x128xf32>
    %113 = arith.mulf %108, %112 : vector<1x128xf32>
    %114 = vector.extract_strided_slice %8 {offsets = [3, 0], sizes = [1, 512], strides = [1, 1]} : vector<8x512xf32> to vector<1x512xf32>
    %cst_42 = arith.constant dense<0.000000e+00> : vector<1x512xf32>
    %115 = tpu.matmul %113, %9, %cst_42 {dimension_numbers = #tpu.dot_dimension_numbers<[1], [0], [0], [1], [0, 0, 1, 1], [], []>} : vector<1x128xf32>, vector<128x512xf32>, vector<1x512xf32> -> vector<1x512xf32>
    %116 = arith.addf %114, %115 : vector<1x512xf32>
    %117 = vector.extract_strided_slice %116 {offsets = [0, 0], sizes = [1, 128], strides = [1, 1]} : vector<1x512xf32> to vector<1x128xf32>
    %cst_43 = arith.constant 5.000000e-01 : f32
    %118 = vector.broadcast %cst_43 : f32 to vector<1x128xf32>
    %119 = arith.mulf %118, %117 : vector<1x128xf32>
    %120 = math.tanh %119 : vector<1x128xf32>
    %cst_44 = arith.constant 5.000000e-01 : f32
    %121 = vector.broadcast %cst_44 : f32 to vector<1x128xf32>
    %122 = arith.mulf %121, %120 : vector<1x128xf32>
    %cst_45 = arith.constant 5.000000e-01 : f32
    %123 = vector.broadcast %cst_45 : f32 to vector<1x128xf32>
    %124 = arith.addf %122, %123 : vector<1x128xf32>
    %125 = vector.extract_strided_slice %116 {offsets = [0, 128], sizes = [1, 128], strides = [1, 1]} : vector<1x512xf32> to vector<1x128xf32>
    %cst_46 = arith.constant 5.000000e-01 : f32
    %126 = vector.broadcast %cst_46 : f32 to vector<1x128xf32>
    %127 = arith.mulf %126, %125 : vector<1x128xf32>
    %128 = math.tanh %127 : vector<1x128xf32>
    %cst_47 = arith.constant 5.000000e-01 : f32
    %129 = vector.broadcast %cst_47 : f32 to vector<1x128xf32>
    %130 = arith.mulf %129, %128 : vector<1x128xf32>
    %cst_48 = arith.constant 5.000000e-01 : f32
    %131 = vector.broadcast %cst_48 : f32 to vector<1x128xf32>
    %132 = arith.addf %130, %131 : vector<1x128xf32>
    %133 = vector.extract_strided_slice %116 {offsets = [0, 256], sizes = [1, 128], strides = [1, 1]} : vector<1x512xf32> to vector<1x128xf32>
    %134 = math.tanh %133 : vector<1x128xf32>
    %135 = vector.extract_strided_slice %116 {offsets = [0, 384], sizes = [1, 128], strides = [1, 1]} : vector<1x512xf32> to vector<1x128xf32>
    %cst_49 = arith.constant 5.000000e-01 : f32
    %136 = vector.broadcast %cst_49 : f32 to vector<1x128xf32>
    %137 = arith.mulf %136, %135 : vector<1x128xf32>
    %138 = math.tanh %137 : vector<1x128xf32>
    %cst_50 = arith.constant 5.000000e-01 : f32
    %139 = vector.broadcast %cst_50 : f32 to vector<1x128xf32>
    %140 = arith.mulf %139, %138 : vector<1x128xf32>
    %cst_51 = arith.constant 5.000000e-01 : f32
    %141 = vector.broadcast %cst_51 : f32 to vector<1x128xf32>
    %142 = arith.addf %140, %141 : vector<1x128xf32>
    %143 = arith.mulf %132, %111 : vector<1x128xf32>
    %144 = arith.mulf %124, %134 : vector<1x128xf32>
    %145 = arith.addf %143, %144 : vector<1x128xf32>
    %146 = math.tanh %145 : vector<1x128xf32>
    %147 = arith.mulf %142, %146 : vector<1x128xf32>
    %148 = vector.extract_strided_slice %8 {offsets = [4, 0], sizes = [1, 512], strides = [1, 1]} : vector<8x512xf32> to vector<1x512xf32>
    %cst_52 = arith.constant dense<0.000000e+00> : vector<1x512xf32>
    %149 = tpu.matmul %147, %9, %cst_52 {dimension_numbers = #tpu.dot_dimension_numbers<[1], [0], [0], [1], [0, 0, 1, 1], [], []>} : vector<1x128xf32>, vector<128x512xf32>, vector<1x512xf32> -> vector<1x512xf32>
    %150 = arith.addf %148, %149 : vector<1x512xf32>
    %151 = vector.extract_strided_slice %150 {offsets = [0, 0], sizes = [1, 128], strides = [1, 1]} : vector<1x512xf32> to vector<1x128xf32>
    %cst_53 = arith.constant 5.000000e-01 : f32
    %152 = vector.broadcast %cst_53 : f32 to vector<1x128xf32>
    %153 = arith.mulf %152, %151 : vector<1x128xf32>
    %154 = math.tanh %153 : vector<1x128xf32>
    %cst_54 = arith.constant 5.000000e-01 : f32
    %155 = vector.broadcast %cst_54 : f32 to vector<1x128xf32>
    %156 = arith.mulf %155, %154 : vector<1x128xf32>
    %cst_55 = arith.constant 5.000000e-01 : f32
    %157 = vector.broadcast %cst_55 : f32 to vector<1x128xf32>
    %158 = arith.addf %156, %157 : vector<1x128xf32>
    %159 = vector.extract_strided_slice %150 {offsets = [0, 128], sizes = [1, 128], strides = [1, 1]} : vector<1x512xf32> to vector<1x128xf32>
    %cst_56 = arith.constant 5.000000e-01 : f32
    %160 = vector.broadcast %cst_56 : f32 to vector<1x128xf32>
    %161 = arith.mulf %160, %159 : vector<1x128xf32>
    %162 = math.tanh %161 : vector<1x128xf32>
    %cst_57 = arith.constant 5.000000e-01 : f32
    %163 = vector.broadcast %cst_57 : f32 to vector<1x128xf32>
    %164 = arith.mulf %163, %162 : vector<1x128xf32>
    %cst_58 = arith.constant 5.000000e-01 : f32
    %165 = vector.broadcast %cst_58 : f32 to vector<1x128xf32>
    %166 = arith.addf %164, %165 : vector<1x128xf32>
    %167 = vector.extract_strided_slice %150 {offsets = [0, 256], sizes = [1, 128], strides = [1, 1]} : vector<1x512xf32> to vector<1x128xf32>
    %168 = math.tanh %167 : vector<1x128xf32>
    %169 = vector.extract_strided_slice %150 {offsets = [0, 384], sizes = [1, 128], strides = [1, 1]} : vector<1x512xf32> to vector<1x128xf32>
    %cst_59 = arith.constant 5.000000e-01 : f32
    %170 = vector.broadcast %cst_59 : f32 to vector<1x128xf32>
    %171 = arith.mulf %170, %169 : vector<1x128xf32>
    %172 = math.tanh %171 : vector<1x128xf32>
    %cst_60 = arith.constant 5.000000e-01 : f32
    %173 = vector.broadcast %cst_60 : f32 to vector<1x128xf32>
    %174 = arith.mulf %173, %172 : vector<1x128xf32>
    %cst_61 = arith.constant 5.000000e-01 : f32
    %175 = vector.broadcast %cst_61 : f32 to vector<1x128xf32>
    %176 = arith.addf %174, %175 : vector<1x128xf32>
    %177 = arith.mulf %166, %145 : vector<1x128xf32>
    %178 = arith.mulf %158, %168 : vector<1x128xf32>
    %179 = arith.addf %177, %178 : vector<1x128xf32>
    %180 = math.tanh %179 : vector<1x128xf32>
    %181 = arith.mulf %176, %180 : vector<1x128xf32>
    %182 = vector.extract_strided_slice %8 {offsets = [5, 0], sizes = [1, 512], strides = [1, 1]} : vector<8x512xf32> to vector<1x512xf32>
    %cst_62 = arith.constant dense<0.000000e+00> : vector<1x512xf32>
    %183 = tpu.matmul %181, %9, %cst_62 {dimension_numbers = #tpu.dot_dimension_numbers<[1], [0], [0], [1], [0, 0, 1, 1], [], []>} : vector<1x128xf32>, vector<128x512xf32>, vector<1x512xf32> -> vector<1x512xf32>
    %184 = arith.addf %182, %183 : vector<1x512xf32>
    %185 = vector.extract_strided_slice %184 {offsets = [0, 0], sizes = [1, 128], strides = [1, 1]} : vector<1x512xf32> to vector<1x128xf32>
    %cst_63 = arith.constant 5.000000e-01 : f32
    %186 = vector.broadcast %cst_63 : f32 to vector<1x128xf32>
    %187 = arith.mulf %186, %185 : vector<1x128xf32>
    %188 = math.tanh %187 : vector<1x128xf32>
    %cst_64 = arith.constant 5.000000e-01 : f32
    %189 = vector.broadcast %cst_64 : f32 to vector<1x128xf32>
    %190 = arith.mulf %189, %188 : vector<1x128xf32>
    %cst_65 = arith.constant 5.000000e-01 : f32
    %191 = vector.broadcast %cst_65 : f32 to vector<1x128xf32>
    %192 = arith.addf %190, %191 : vector<1x128xf32>
    %193 = vector.extract_strided_slice %184 {offsets = [0, 128], sizes = [1, 128], strides = [1, 1]} : vector<1x512xf32> to vector<1x128xf32>
    %cst_66 = arith.constant 5.000000e-01 : f32
    %194 = vector.broadcast %cst_66 : f32 to vector<1x128xf32>
    %195 = arith.mulf %194, %193 : vector<1x128xf32>
    %196 = math.tanh %195 : vector<1x128xf32>
    %cst_67 = arith.constant 5.000000e-01 : f32
    %197 = vector.broadcast %cst_67 : f32 to vector<1x128xf32>
    %198 = arith.mulf %197, %196 : vector<1x128xf32>
    %cst_68 = arith.constant 5.000000e-01 : f32
    %199 = vector.broadcast %cst_68 : f32 to vector<1x128xf32>
    %200 = arith.addf %198, %199 : vector<1x128xf32>
    %201 = vector.extract_strided_slice %184 {offsets = [0, 256], sizes = [1, 128], strides = [1, 1]} : vector<1x512xf32> to vector<1x128xf32>
    %202 = math.tanh %201 : vector<1x128xf32>
    %203 = vector.extract_strided_slice %184 {offsets = [0, 384], sizes = [1, 128], strides = [1, 1]} : vector<1x512xf32> to vector<1x128xf32>
    %cst_69 = arith.constant 5.000000e-01 : f32
    %204 = vector.broadcast %cst_69 : f32 to vector<1x128xf32>
    %205 = arith.mulf %204, %203 : vector<1x128xf32>
    %206 = math.tanh %205 : vector<1x128xf32>
    %cst_70 = arith.constant 5.000000e-01 : f32
    %207 = vector.broadcast %cst_70 : f32 to vector<1x128xf32>
    %208 = arith.mulf %207, %206 : vector<1x128xf32>
    %cst_71 = arith.constant 5.000000e-01 : f32
    %209 = vector.broadcast %cst_71 : f32 to vector<1x128xf32>
    %210 = arith.addf %208, %209 : vector<1x128xf32>
    %211 = arith.mulf %200, %179 : vector<1x128xf32>
    %212 = arith.mulf %192, %202 : vector<1x128xf32>
    %213 = arith.addf %211, %212 : vector<1x128xf32>
    %214 = math.tanh %213 : vector<1x128xf32>
    %215 = arith.mulf %210, %214 : vector<1x128xf32>
    %216 = vector.extract_strided_slice %8 {offsets = [6, 0], sizes = [1, 512], strides = [1, 1]} : vector<8x512xf32> to vector<1x512xf32>
    %cst_72 = arith.constant dense<0.000000e+00> : vector<1x512xf32>
    %217 = tpu.matmul %215, %9, %cst_72 {dimension_numbers = #tpu.dot_dimension_numbers<[1], [0], [0], [1], [0, 0, 1, 1], [], []>} : vector<1x128xf32>, vector<128x512xf32>, vector<1x512xf32> -> vector<1x512xf32>
    %218 = arith.addf %216, %217 : vector<1x512xf32>
    %219 = vector.extract_strided_slice %218 {offsets = [0, 0], sizes = [1, 128], strides = [1, 1]} : vector<1x512xf32> to vector<1x128xf32>
    %cst_73 = arith.constant 5.000000e-01 : f32
    %220 = vector.broadcast %cst_73 : f32 to vector<1x128xf32>
    %221 = arith.mulf %220, %219 : vector<1x128xf32>
    %222 = math.tanh %221 : vector<1x128xf32>
    %cst_74 = arith.constant 5.000000e-01 : f32
    %223 = vector.broadcast %cst_74 : f32 to vector<1x128xf32>
    %224 = arith.mulf %223, %222 : vector<1x128xf32>
    %cst_75 = arith.constant 5.000000e-01 : f32
    %225 = vector.broadcast %cst_75 : f32 to vector<1x128xf32>
    %226 = arith.addf %224, %225 : vector<1x128xf32>
    %227 = vector.extract_strided_slice %218 {offsets = [0, 128], sizes = [1, 128], strides = [1, 1]} : vector<1x512xf32> to vector<1x128xf32>
    %cst_76 = arith.constant 5.000000e-01 : f32
    %228 = vector.broadcast %cst_76 : f32 to vector<1x128xf32>
    %229 = arith.mulf %228, %227 : vector<1x128xf32>
    %230 = math.tanh %229 : vector<1x128xf32>
    %cst_77 = arith.constant 5.000000e-01 : f32
    %231 = vector.broadcast %cst_77 : f32 to vector<1x128xf32>
    %232 = arith.mulf %231, %230 : vector<1x128xf32>
    %cst_78 = arith.constant 5.000000e-01 : f32
    %233 = vector.broadcast %cst_78 : f32 to vector<1x128xf32>
    %234 = arith.addf %232, %233 : vector<1x128xf32>
    %235 = vector.extract_strided_slice %218 {offsets = [0, 256], sizes = [1, 128], strides = [1, 1]} : vector<1x512xf32> to vector<1x128xf32>
    %236 = math.tanh %235 : vector<1x128xf32>
    %237 = vector.extract_strided_slice %218 {offsets = [0, 384], sizes = [1, 128], strides = [1, 1]} : vector<1x512xf32> to vector<1x128xf32>
    %cst_79 = arith.constant 5.000000e-01 : f32
    %238 = vector.broadcast %cst_79 : f32 to vector<1x128xf32>
    %239 = arith.mulf %238, %237 : vector<1x128xf32>
    %240 = math.tanh %239 : vector<1x128xf32>
    %cst_80 = arith.constant 5.000000e-01 : f32
    %241 = vector.broadcast %cst_80 : f32 to vector<1x128xf32>
    %242 = arith.mulf %241, %240 : vector<1x128xf32>
    %cst_81 = arith.constant 5.000000e-01 : f32
    %243 = vector.broadcast %cst_81 : f32 to vector<1x128xf32>
    %244 = arith.addf %242, %243 : vector<1x128xf32>
    %245 = arith.mulf %234, %213 : vector<1x128xf32>
    %246 = arith.mulf %226, %236 : vector<1x128xf32>
    %247 = arith.addf %245, %246 : vector<1x128xf32>
    %248 = math.tanh %247 : vector<1x128xf32>
    %249 = arith.mulf %244, %248 : vector<1x128xf32>
    %250 = vector.extract_strided_slice %8 {offsets = [7, 0], sizes = [1, 512], strides = [1, 1]} : vector<8x512xf32> to vector<1x512xf32>
    %cst_82 = arith.constant dense<0.000000e+00> : vector<1x512xf32>
    %251 = tpu.matmul %249, %9, %cst_82 {dimension_numbers = #tpu.dot_dimension_numbers<[1], [0], [0], [1], [0, 0, 1, 1], [], []>} : vector<1x128xf32>, vector<128x512xf32>, vector<1x512xf32> -> vector<1x512xf32>
    %252 = arith.addf %250, %251 : vector<1x512xf32>
    %253 = vector.extract_strided_slice %252 {offsets = [0, 0], sizes = [1, 128], strides = [1, 1]} : vector<1x512xf32> to vector<1x128xf32>
    %cst_83 = arith.constant 5.000000e-01 : f32
    %254 = vector.broadcast %cst_83 : f32 to vector<1x128xf32>
    %255 = arith.mulf %254, %253 : vector<1x128xf32>
    %256 = math.tanh %255 : vector<1x128xf32>
    %cst_84 = arith.constant 5.000000e-01 : f32
    %257 = vector.broadcast %cst_84 : f32 to vector<1x128xf32>
    %258 = arith.mulf %257, %256 : vector<1x128xf32>
    %cst_85 = arith.constant 5.000000e-01 : f32
    %259 = vector.broadcast %cst_85 : f32 to vector<1x128xf32>
    %260 = arith.addf %258, %259 : vector<1x128xf32>
    %261 = vector.extract_strided_slice %252 {offsets = [0, 128], sizes = [1, 128], strides = [1, 1]} : vector<1x512xf32> to vector<1x128xf32>
    %cst_86 = arith.constant 5.000000e-01 : f32
    %262 = vector.broadcast %cst_86 : f32 to vector<1x128xf32>
    %263 = arith.mulf %262, %261 : vector<1x128xf32>
    %264 = math.tanh %263 : vector<1x128xf32>
    %cst_87 = arith.constant 5.000000e-01 : f32
    %265 = vector.broadcast %cst_87 : f32 to vector<1x128xf32>
    %266 = arith.mulf %265, %264 : vector<1x128xf32>
    %cst_88 = arith.constant 5.000000e-01 : f32
    %267 = vector.broadcast %cst_88 : f32 to vector<1x128xf32>
    %268 = arith.addf %266, %267 : vector<1x128xf32>
    %269 = vector.extract_strided_slice %252 {offsets = [0, 256], sizes = [1, 128], strides = [1, 1]} : vector<1x512xf32> to vector<1x128xf32>
    %270 = math.tanh %269 : vector<1x128xf32>
    %271 = vector.extract_strided_slice %252 {offsets = [0, 384], sizes = [1, 128], strides = [1, 1]} : vector<1x512xf32> to vector<1x128xf32>
    %cst_89 = arith.constant 5.000000e-01 : f32
    %272 = vector.broadcast %cst_89 : f32 to vector<1x128xf32>
    %273 = arith.mulf %272, %271 : vector<1x128xf32>
    %274 = math.tanh %273 : vector<1x128xf32>
    %cst_90 = arith.constant 5.000000e-01 : f32
    %275 = vector.broadcast %cst_90 : f32 to vector<1x128xf32>
    %276 = arith.mulf %275, %274 : vector<1x128xf32>
    %cst_91 = arith.constant 5.000000e-01 : f32
    %277 = vector.broadcast %cst_91 : f32 to vector<1x128xf32>
    %278 = arith.addf %276, %277 : vector<1x128xf32>
    %279 = arith.mulf %268, %247 : vector<1x128xf32>
    %280 = arith.mulf %260, %270 : vector<1x128xf32>
    %281 = arith.addf %279, %280 : vector<1x128xf32>
    %282 = math.tanh %281 : vector<1x128xf32>
    %283 = arith.mulf %278, %282 : vector<1x128xf32>
    %284 = tpu.concatenate %45, %79, %113, %147, %181, %215, %249, %283 in 0 : vector<1x128xf32>, vector<1x128xf32>, vector<1x128xf32>, vector<1x128xf32>, vector<1x128xf32>, vector<1x128xf32>, vector<1x128xf32>, vector<1x128xf32> -> vector<8x128xf32>
    %285 = arith.truncf %284 : vector<8x128xf32> to vector<8x128xbf16>
    %c0_92 = arith.constant 0 : index
    %c0_93 = arith.constant 0 : index
    %286 = vector.load %arg5[%c0_92, %c0_93] : memref<8x128xbf16, #tpu.memory_space<vmem>>, vector<8x128xbf16>
    tpu.vector_store %arg5[%c0_92, %c0_93], %285 {strides = array<i32>} : memref<8x128xbf16, #tpu.memory_space<vmem>>, vector<8x128xbf16>,
    %c0_94 = arith.constant 0 : index
    %c0_95 = arith.constant 0 : index
    %287 = vector.load %arg6[%c0_94, %c0_95] : memref<1x128xf32, #tpu.memory_space<vmem>>, vector<1x128xf32>
    tpu.vector_store %arg6[%c0_94, %c0_95], %283 {strides = array<i32>} : memref<1x128xf32, #tpu.memory_space<vmem>>, vector<1x128xf32>,
    %c0_96 = arith.constant 0 : index
    %c0_97 = arith.constant 0 : index
    %288 = vector.load %arg7[%c0_96, %c0_97] : memref<1x128xf32, #tpu.memory_space<vmem>>, vector<1x128xf32>
    tpu.vector_store %arg7[%c0_96, %c0_97], %281 {strides = array<i32>} : memref<1x128xf32, #tpu.memory_space<vmem>>, vector<1x128xf32>,
    return
  }
  func.func @transform_0(%arg0: i32) -> (i32, i32) {
    %c0_i32 = arith.constant 0 : i32
    %c0_i32_0 = arith.constant 0 : i32
    return %arg0, %c0_i32 : i32, i32
  }
  func.func @transform_1(%arg0: i32) -> (i32, i32) {
    %c0_i32 = arith.constant 0 : i32
    %c0_i32_0 = arith.constant 0 : i32
    %c0_i32_1 = arith.constant 0 : i32
    return %c0_i32, %c0_i32_0 : i32, i32
  }
  func.func @transform_2(%arg0: i32) -> (i32, i32) {
    %c0_i32 = arith.constant 0 : i32
    %c0_i32_0 = arith.constant 0 : i32
    %c0_i32_1 = arith.constant 0 : i32
    return %c0_i32, %c0_i32_0 : i32, i32
  }
  func.func @transform_3(%arg0: i32) -> (i32, i32) {
    %c0_i32 = arith.constant 0 : i32
    %c0_i32_0 = arith.constant 0 : i32
    %c0_i32_1 = arith.constant 0 : i32
    return %c0_i32, %c0_i32_0 : i32, i32
  }
  func.func @transform_4(%arg0: i32) -> (i32, i32) {
    %c0_i32 = arith.constant 0 : i32
    %c0_i32_0 = arith.constant 0 : i32
    return %arg0, %c0_i32 : i32, i32
  }
}

</mosaic_0001>

<llo_original>
// kernel: tpu_custom_call.1
$region0: #{tpu_custom_call.1}
  #allocation0 [shape = 'u32[]', space=smem, size = 0x4, offset = 0x4, fixed_abs, tag = 'smem constant byte address 0x4 - core index']
  #allocation1 [shape = 'u32[144,128]{1,0:T(1,128)}', space=vmem, size = 0x12000, scoped, tag = 'internal scratch']
  #allocation2 [shape = 'f32[1,128]{1,0:T(1,128)}', space=vmem, size = 0x200, scoped, tag = 'scratch operand']
  #allocation3 [shape = 'f32[1,128]{1,0:T(1,128)}', space=vmem, size = 0x200, scoped, tag = 'scratch operand']
  %s0 = inlined_call_operand.hbm [shape: f32[8,128], index: 0, kind: input, shape index: {}]
  %s1 = inlined_call_operand.hbm [shape: f32[128,512], index: 1, kind: input, shape index: {}]
  %s2 = inlined_call_operand.hbm [shape: f32[128,512], index: 2, kind: input, shape index: {}]
  %s3 = inlined_call_operand.vmem [shape: f32[1,512], index: 3, kind: input, shape index: {}]
  %s4 = inlined_call_operand.hbm [shape: bf16[8,128], index: 4, kind: output, shape index: {}]
  %s5 = sld [smem:[#allocation0]]
  $region42: #{tpu_custom_call.1} parent=0
    _
  %s7 = ssub.s32 1, %s5
  %s8 = scalar_select 0, %s7, %s5
  $region1: #{tpu_custom_call.1} parent=0
    #allocation4 [shape = 'u8[4096]{0}', space=vmem, size = 0x1000, scoped, tag = 'input window, operand 0, single buffered']
    #allocation5 [shape = 's32[1]{0}', space=sflag, size = 0x4, scoped, tag = 'scoped memory for tpu_custom_call.1']
    #allocation6 [shape = 's32[1]{0}', space=sflag, size = 0x4, scoped, tag = 'scoped memory for tpu_custom_call.1']
    #allocation7 [shape = 'u8[262144]{0}', space=vmem, size = 0x40000, scoped, tag = 'input window, operand 1, single buffered']
    #allocation8 [shape = 's32[1]{0}', space=sflag, size = 0x4, scoped, tag = 'scoped memory for tpu_custom_call.1']
    #allocation9 [shape = 'u8[262144]{0}', space=vmem, size = 0x40000, scoped, tag = 'input window, operand 2, single buffered']
    #allocation10 [shape = 'u8[2048]{0}', space=vmem, size = 0x800, scoped, tag = 'output window, operand 0, single buffered']
    %9 = vsyncpa [#allocation5], 0
    %10 = vsyncpa [#allocation8], 0
    %11 = vsyncpa [#allocation6], 0
    // Predicated region
    $region2: #{tpu_custom_call.1} parent=1 // pred_check
      _
    $region3: #{tpu_custom_call.1} parent=1 // pred_check_branch
      %13 = sbr.rel (0) target = $region5
    $region4: #{tpu_custom_call.1} parent=1 // pred_region
      %s15 = ssub.s32 128, 128
      %16 = vsyncadd [#allocation5], %s15
      %s18 = sshll.u32 [#allocation4], 4
      %s19 = int_to_ptr.vmem [resolvable:$true] %s18
      %21 = dma.hbm_to_vmem [thread:$0]  %s0, 128, %s19, [#allocation5]
    $region5: #{tpu_custom_call.1} parent=1 // pred_fallthru
      _
    // Predicated region
    $region6: #{tpu_custom_call.1} parent=1 // pred_check
      _
    $region7: #{tpu_custom_call.1} parent=1 // pred_check_branch
      %23 = sbr.rel (0) target = $region9
    $region8: #{tpu_custom_call.1} parent=1 // pred_region
      %s25 = ssub.s32 8192, 8192
      %26 = vsyncadd [#allocation8], %s25
      %s27 = sshll.u32 [#allocation7], 4
      %s28 = int_to_ptr.vmem [resolvable:$true] %s27
      %33 = dma.hbm_to_vmem [thread:$0]  %s1, 8192, %s28, [#allocation8], 512, 512, 32
    $region9: #{tpu_custom_call.1} parent=1 // pred_fallthru
      _
    // Predicated region
    $region10: #{tpu_custom_call.1} parent=1 // pred_check
      _
    $region11: #{tpu_custom_call.1} parent=1 // pred_check_branch
      %35 = sbr.rel (0) target = $region13
    $region12: #{tpu_custom_call.1} parent=1 // pred_region
      %s37 = ssub.s32 8192, 8192
      %38 = vsyncadd [#allocation8], %s37
      %s39 = sshll.u32 [#allocation9], 4
      %s40 = int_to_ptr.vmem [resolvable:$true] %s39
      %45 = dma.hbm_to_vmem [thread:$0]  %s2, 8192, %s40, [#allocation8], 512, 512, 32
    $region13: #{tpu_custom_call.1} parent=1 // pred_fallthru
      _
    // Predicated region
    $region14: #{tpu_custom_call.1} parent=1 // pred_check
      _
    $region15: #{tpu_custom_call.1} parent=1 // pred_check_branch
      %47 = sbr.rel (0) target = $region17
    $region16: #{tpu_custom_call.1} parent=1 // pred_region
      _
    $region17: #{tpu_custom_call.1} parent=1 // pred_fallthru
      _
    // Predicated region
    $region18: #{tpu_custom_call.1} parent=1 // pred_check
      _
    $region19: #{tpu_custom_call.1} parent=1 // pred_check_branch
      %49 = sbr.rel (0) target = $region21
    $region20: #{tpu_custom_call.1} parent=1 // pred_region
      %50 = dma.done [#allocation5], 128
    $region21: #{tpu_custom_call.1} parent=1 // pred_fallthru
      _
    // Predicated region
    $region22: #{tpu_custom_call.1} parent=1 // pred_check
      _
    $region23: #{tpu_custom_call.1} parent=1 // pred_check_branch
      %52 = sbr.rel (0) target = $region25
    $region24: #{tpu_custom_call.1} parent=1 // pred_region
      %53 = dma.done [#allocation8], 8192
    $region25: #{tpu_custom_call.1} parent=1 // pred_fallthru
      _
    // Predicated region
    $region26: #{tpu_custom_call.1} parent=1 // pred_check
      _
    $region27: #{tpu_custom_call.1} parent=1 // pred_check_branch
      %55 = sbr.rel (0) target = $region29
    $region28: #{tpu_custom_call.1} parent=1 // pred_region
      %56 = dma.done [#allocation8], 8192
    $region29: #{tpu_custom_call.1} parent=1 // pred_fallthru
      _
    %p57 = scmp.eq.s32.totalorder 0, 0
    // Predicated region
    $region30: #{tpu_custom_call.1} parent=1 // pred_check
      %p58 = pneg %p57
    $region31: #{tpu_custom_call.1} parent=1 // pred_check_branch
      %60 = sbr.rel (%p58) target = $region33
    $region32: #{tpu_custom_call.1} parent=1 // pred_region
      %61 = vst [vmem:[#allocation2] sm:$0x1] 0.0
      %62 = vst [vmem:[#allocation3] sm:$0x1] 0.0
    $region33: #{tpu_custom_call.1} parent=1 // pred_fallthru
      _
    %v63 = vld [vmem:[#allocation4] sm:$0xff]
    %v64 = vld [vmem:[#allocation7] sm:$0xff]
    %v65 = vld [vmem:[#allocation7 + $0x8] sm:$0xff]
    %v66 = vld [vmem:[#allocation7 + $0x10] sm:$0xff]
    %v67 = vld [vmem:[#allocation7 + $0x18] sm:$0xff]
    %v68 = vld [vmem:[#allocation7 + $0x20] sm:$0xff]
    %v69 = vld [vmem:[#allocation7 + $0x28] sm:$0xff]
    %v70 = vld [vmem:[#allocation7 + $0x30] sm:$0xff]
    %v71 = vld [vmem:[#allocation7 + $0x38] sm:$0xff]
    %v72 = vld [vmem:[#allocation7 + $0x40] sm:$0xff]
    %v73 = vld [vmem:[#allocation7 + $0x48] sm:$0xff]
    %v74 = vld [vmem:[#allocation7 + $0x50] sm:$0xff]
    %v75 = vld [vmem:[#allocation7 + $0x58] sm:$0xff]
    %v76 = vld [vmem:[#allocation7 + $0x60] sm:$0xff]
    %v77 = vld [vmem:[#allocation7 + $0x68] sm:$0xff]
    %v78 = vld [vmem:[#allocation7 + $0x70] sm:$0xff]
    %v79 = vld [vmem:[#allocation7 + $0x78] sm:$0xff]
    %v80 = vld [vmem:[#allocation7 + $0x80] sm:$0xff]
    %v81 = vld [vmem:[#allocation7 + $0x88] sm:$0xff]
    %v82 = vld [vmem:[#allocation7 + $0x90] sm:$0xff]
    %v83 = vld [vmem:[#allocation7 + $0x98] sm:$0xff]
    %v84 = vld [vmem:[#allocation7 + $0xa0] sm:$0xff]
    %v85 = vld [vmem:[#allocation7 + $0xa8] sm:$0xff]
    %v86 = vld [vmem:[#allocation7 + $0xb0] sm:$0xff]
    %v87 = vld [vmem:[#allocation7 + $0xb8] sm:$0xff]
    %v88 = vld [vmem:[#allocation7 + $0xc0] sm:$0xff]
    %v89 = vld [vmem:[#allocation7 + $0xc8] sm:$0xff]
    %v90 = vld [vmem:[#allocation7 + $0xd0] sm:$0xff]
    %v91 = vld [vmem:[#allocation7 + $0xd8] sm:$0xff]
    %v92 = vld [vmem:[#allocation7 + $0xe0] sm:$0xff]
    %v93 = vld [vmem:[#allocation7 + $0xe8] sm:$0xff]
    %v94 = vld [vmem:[#allocation7 + $0xf0] sm:$0xff]
    %v95 = vld [vmem:[#allocation7 + $0xf8] sm:$0xff]
    %v96 = vld [vmem:[#allocation7 + $0x100] sm:$0xff]
    %v97 = vld [vmem:[#allocation7 + $0x108] sm:$0xff]
    %v98 = vld [vmem:[#allocation7 + $0x110] sm:$0xff]
    %v99 = vld [vmem:[#allocation7 + $0x118] sm:$0xff]
    %v100 = vld [vmem:[#allocation7 + $0x120] sm:$0xff]
    %v101 = vld [vmem:[#allocation7 + $0x128] sm:$0xff]
    %v102 = vld [vmem:[#allocation7 + $0x130] sm:$0xff]
    %v103 = vld [vmem:[#allocation7 + $0x138] sm:$0xff]
    %v104 = vld [vmem:[#allocation7 + $0x140] sm:$0xff]
    %v105 = vld [vmem:[#allocation7 + $0x148] sm:$0xff]
    %v106 = vld [vmem:[#allocation7 + $0x150] sm:$0xff]
    %v107 = vld [vmem:[#allocation7 + $0x158] sm:$0xff]
    %v108 = vld [vmem:[#allocation7 + $0x160] sm:$0xff]
    %v109 = vld [vmem:[#allocation7 + $0x168] sm:$0xff]
    %v110 = vld [vmem:[#allocation7 + $0x170] sm:$0xff]
    %v111 = vld [vmem:[#allocation7 + $0x178] sm:$0xff]
    %v112 = vld [vmem:[#allocation7 + $0x180] sm:$0xff]
    %v113 = vld [vmem:[#allocation7 + $0x188] sm:$0xff]
    %v114 = vld [vmem:[#allocation7 + $0x190] sm:$0xff]
    %v115 = vld [vmem:[#allocation7 + $0x198] sm:$0xff]
    %v116 = vld [vmem:[#allocation7 + $0x1a0] sm:$0xff]
    %v117 = vld [vmem:[#allocation7 + $0x1a8] sm:$0xff]
    %v118 = vld [vmem:[#allocation7 + $0x1b0] sm:$0xff]
    %v119 = vld [vmem:[#allocation7 + $0x1b8] sm:$0xff]
    %v120 = vld [vmem:[#allocation7 + $0x1c0] sm:$0xff]
    %v121 = vld [vmem:[#allocation7 + $0x1c8] sm:$0xff]
    %v122 = vld [vmem:[#allocation7 + $0x1d0] sm:$0xff]
    %v123 = vld [vmem:[#allocation7 + $0x1d8] sm:$0xff]
    %v124 = vld [vmem:[#allocation7 + $0x1e0] sm:$0xff]
    %v125 = vld [vmem:[#allocation7 + $0x1e8] sm:$0xff]
    %v126 = vld [vmem:[#allocation7 + $0x1f0] sm:$0xff]
    %v127 = vld [vmem:[#allocation7 + $0x1f8] sm:$0xff]
    %v128 = vld [vmem:[%s3] sm:$0xf]
    %v130 = vlaneseq
    %v131 = vshrl.u32 %v130, 7
    %v132 = vsub.s32 0, %v131
    %v133 = vrot.slane %v128, %v132
    %v134 = vlaneseq
    %v135 = vshrl.u32 %v134, 7
    %v136 = vsub.s32 1, %v135
    %v137 = vrot.slane %v128, %v136
    %v138 = vlaneseq
    %v139 = vshrl.u32 %v138, 7
    %v140 = vsub.s32 2, %v139
    %v141 = vrot.slane %v128, %v140
    %v142 = vlaneseq
    %v143 = vshrl.u32 %v142, 7
    %v144 = vsub.s32 3, %v143
    %v145 = vrot.slane %v128, %v144
    %150 = vmatprep.subr.mxu0 %v65
    %151 = vmatpush1.msra.mxu0 %v64
    %152 = vmatprep.subr.mxu0 %v69
    %153 = vmatpush1.msra.mxu0 %v68
    %154 = vmatprep.subr.mxu0 %v73
    %155 = vmatpush1.msra.mxu0 %v72
    %156 = vmatprep.subr.mxu0 %v77
    %157 = vmatpush1.msra.mxu0 %v76
    %158 = vmatprep.subr.mxu0 %v81
    %159 = vmatpush1.msra.mxu0 %v80
    %160 = vmatprep.subr.mxu0 %v85
    %161 = vmatpush1.msra.mxu0 %v84
    %162 = vmatprep.subr.mxu0 %v89
    %163 = vmatpush1.msra.mxu0 %v88
    %164 = vmatprep.subr.mxu0 %v93
    %165 = vmatpush1.msra.mxu0 %v92
    %166 = vmatprep.subr.mxu0 %v97
    %167 = vmatpush1.msra.mxu0 %v96
    %168 = vmatprep.subr.mxu0 %v101
    %169 = vmatpush1.msra.mxu0 %v100
    %170 = vmatprep.subr.mxu0 %v105
    %171 = vmatpush1.msra.mxu0 %v104
    %172 = vmatprep.subr.mxu0 %v109
    %173 = vmatpush1.msra.mxu0 %v108
    %174 = vmatprep.subr.mxu0 %v113
    %175 = vmatpush1.msra.mxu0 %v112
    %176 = vmatprep.subr.mxu0 %v117
    %177 = vmatpush1.msra.mxu0 %v116
    %178 = vmatprep.subr.mxu0 %v121
    %179 = vmatpush1.msra.mxu0 %v120
    %180 = vmatprep.subr.mxu0 %v125
    %181 = vmatpush1.msra.mxu0 %v124
    %182 = vmatprep.subr.mxu0 0.0
    %183 = vmatpush1.msra.mxu0 0.0
    %184 = vmatprep.subr.mxu0 0.0
    %185 = vmatpush1.msra.mxu0 0.0
    %186 = vmatprep.subr.mxu0 0.0
    %187 = vmatpush1.msra.mxu0 0.0
    %188 = vmatprep.subr.mxu0 0.0
    %189 = vmatpush1.msra.mxu0 0.0
    %190 = vmatprep.subr.mxu0 0.0
    %191 = vmatpush1.msra.mxu0 0.0
    %192 = vmatprep.subr.mxu0 0.0
    %193 = vmatpush1.msra.mxu0 0.0
    %194 = vmatprep.subr.mxu0 0.0
    %195 = vmatpush1.msra.mxu0 0.0
    %196 = vmatprep.subr.mxu0 0.0
    %197 = vmatpush1.msra.mxu0 0.0
    %198 = vmatprep.subr.mxu0 0.0
    %199 = vmatpush1.msra.mxu0 0.0
    %200 = vmatprep.subr.mxu0 0.0
    %201 = vmatpush1.msra.mxu0 0.0
    %202 = vmatprep.subr.mxu0 0.0
    %203 = vmatpush1.msra.mxu0 0.0
    %204 = vmatprep.subr.mxu0 0.0
    %205 = vmatpush1.msra.mxu0 0.0
    %206 = vmatprep.subr.mxu0 0.0
    %207 = vmatpush1.msra.mxu0 0.0
    %208 = vmatprep.subr.mxu0 0.0
    %209 = vmatpush1.msra.mxu0 0.0
    %210 = vmatprep.subr.mxu0 0.0
    %211 = vmatpush1.msra.mxu0 0.0
    %212 = vmatprep.subr.mxu0 0.0
    %213 = vmatpush1.msra.mxu0 0.0
    %214 = vmatprep.mubr.f32.mxu0 0.0
    %215 = vmatmul.mubr.f32.gmra.mrb[0].mxu0 %v63
    %v216 = vpop.f32.mrb[0].mxu0
    %v217 = vadd.f32 %v133, %v216
    %v218 = vpop.f32.mrb[0].mxu0
    %v219 = vadd.f32 %v137, %v218
    %220 = vdwg.mxu0
    %221 = vmatprep.subr.mxu0 %v67
    %222 = vmatpush1.msra.mxu0 %v66
    %223 = vmatprep.subr.mxu0 %v71
    %224 = vmatpush1.msra.mxu0 %v70
    %225 = vmatprep.subr.mxu0 %v75
    %226 = vmatpush1.msra.mxu0 %v74
    %227 = vmatprep.subr.mxu0 %v79
    %228 = vmatpush1.msra.mxu0 %v78
    %229 = vmatprep.subr.mxu0 %v83
    %230 = vmatpush1.msra.mxu0 %v82
    %231 = vmatprep.subr.mxu0 %v87
    %232 = vmatpush1.msra.mxu0 %v86
    %233 = vmatprep.subr.mxu0 %v91
    %234 = vmatpush1.msra.mxu0 %v90
    %235 = vmatprep.subr.mxu0 %v95
    %236 = vmatpush1.msra.mxu0 %v94
    %237 = vmatprep.subr.mxu0 %v99
    %238 = vmatpush1.msra.mxu0 %v98
    %239 = vmatprep.subr.mxu0 %v103
    %240 = vmatpush1.msra.mxu0 %v102
    %241 = vmatprep.subr.mxu0 %v107
    %242 = vmatpush1.msra.mxu0 %v106
    %243 = vmatprep.subr.mxu0 %v111
    %244 = vmatpush1.msra.mxu0 %v110
    %245 = vmatprep.subr.mxu0 %v115
    %246 = vmatpush1.msra.mxu0 %v114
    %247 = vmatprep.subr.mxu0 %v119
    %248 = vmatpush1.msra.mxu0 %v118
    %249 = vmatprep.subr.mxu0 %v123
    %250 = vmatpush1.msra.mxu0 %v122
    %251 = vmatprep.subr.mxu0 %v127
    %252 = vmatpush1.msra.mxu0 %v126
    %253 = vmatprep.subr.mxu0 0.0
    %254 = vmatpush1.msra.mxu0 0.0
    %255 = vmatprep.subr.mxu0 0.0
    %256 = vmatpush1.msra.mxu0 0.0
    %257 = vmatprep.subr.mxu0 0.0
    %258 = vmatpush1.msra.mxu0 0.0
    %259 = vmatprep.subr.mxu0 0.0
    %260 = vmatpush1.msra.mxu0 0.0
    %261 = vmatprep.subr.mxu0 0.0
    %262 = vmatpush1.msra.mxu0 0.0
    %263 = vmatprep.subr.mxu0 0.0
    %264 = vmatpush1.msra.mxu0 0.0
    %265 = vmatprep.subr.mxu0 0.0
    %266 = vmatpush1.msra.mxu0 0.0
    %267 = vmatprep.subr.mxu0 0.0
    %268 = vmatpush1.msra.mxu0 0.0
    %269 = vmatprep.subr.mxu0 0.0
    %270 = vmatpush1.msra.mxu0 0.0
    %271 = vmatprep.subr.mxu0 0.0
    %272 = vmatpush1.msra.mxu0 0.0
    %273 = vmatprep.subr.mxu0 0.0
    %274 = vmatpush1.msra.mxu0 0.0
    %275 = vmatprep.subr.mxu0 0.0
    %276 = vmatpush1.msra.mxu0 0.0
    %277 = vmatprep.subr.mxu0 0.0
    %278 = vmatpush1.msra.mxu0 0.0
    %279 = vmatprep.subr.mxu0 0.0
    %280 = vmatpush1.msra.mxu0 0.0
    %281 = vmatprep.subr.mxu0 0.0
    %282 = vmatpush1.msra.mxu0 0.0
    %283 = vmatprep.subr.mxu0 0.0
    %284 = vmatpush1.msra.mxu0 0.0
    %285 = vmatprep.mubr.f32.mxu0 0.0
    %286 = vmatmul.mubr.f32.gmra.mrb[0].mxu0 %v63
    %v287 = vpop.f32.mrb[0].mxu0
    %v288 = vadd.f32 %v141, %v287
    %v289 = vpop.f32.mrb[0].mxu0
    %v290 = vadd.f32 %v145, %v289
    %291 = vdwg.mxu0
    %v292 = vld [vmem:[#allocation9] sm:$0xff]
    %v293 = vld [vmem:[#allocation9 + $0x8] sm:$0xff]
    %v294 = vld [vmem:[#allocation9 + $0x10] sm:$0xff]
    %v295 = vld [vmem:[#allocation9 + $0x18] sm:$0xff]
    %v296 = vld [vmem:[#allocation9 + $0x20] sm:$0xff]
    %v297 = vld [vmem:[#allocation9 + $0x28] sm:$0xff]
    %v298 = vld [vmem:[#allocation9 + $0x30] sm:$0xff]
    %v299 = vld [vmem:[#allocation9 + $0x38] sm:$0xff]
    %v300 = vld [vmem:[#allocation9 + $0x40] sm:$0xff]
    %v301 = vld [vmem:[#allocation9 + $0x48] sm:$0xff]
    %v302 = vld [vmem:[#allocation9 + $0x50] sm:$0xff]
    %v303 = vld [vmem:[#allocation9 + $0x58] sm:$0xff]
    %v304 = vld [vmem:[#allocation9 + $0x60] sm:$0xff]
    %v305 = vld [vmem:[#allocation9 + $0x68] sm:$0xff]
    %v306 = vld [vmem:[#allocation9 + $0x70] sm:$0xff]
    %v307 = vld [vmem:[#allocation9 + $0x78] sm:$0xff]
    %v308 = vld [vmem:[#allocation9 + $0x80] sm:$0xff]
    %v309 = vld [vmem:[#allocation9 + $0x88] sm:$0xff]
    %v310 = vld [vmem:[#allocation9 + $0x90] sm:$0xff]
    %v311 = vld [vmem:[#allocation9 + $0x98] sm:$0xff]
    %v312 = vld [vmem:[#allocation9 + $0xa0] sm:$0xff]
    %v313 = vld [vmem:[#allocation9 + $0xa8] sm:$0xff]
    %v314 = vld [vmem:[#allocation9 + $0xb0] sm:$0xff]
    %v315 = vld [vmem:[#allocation9 + $0xb8] sm:$0xff]
    %v316 = vld [vmem:[#allocation9 + $0xc0] sm:$0xff]
    %v317 = vld [vmem:[#allocation9 + $0xc8] sm:$0xff]
    %v318 = vld [vmem:[#allocation9 + $0xd0] sm:$0xff]
    %v319 = vld [vmem:[#allocation9 + $0xd8] sm:$0xff]
    %v320 = vld [vmem:[#allocation9 + $0xe0] sm:$0xff]
    %v321 = vld [vmem:[#allocation9 + $0xe8] sm:$0xff]
    %v322 = vld [vmem:[#allocation9 + $0xf0] sm:$0xff]
    %v323 = vld [vmem:[#allocation9 + $0xf8] sm:$0xff]
    %v324 = vld [vmem:[#allocation9 + $0x100] sm:$0xff]
    %v325 = vld [vmem:[#allocation9 + $0x108] sm:$0xff]
    %v326 = vld [vmem:[#allocation9 + $0x110] sm:$0xff]
    %v327 = vld [vmem:[#allocation9 + $0x118] sm:$0xff]
    %v328 = vld [vmem:[#allocation9 + $0x120] sm:$0xff]
    %v329 = vld [vmem:[#allocation9 + $0x128] sm:$0xff]
    %v330 = vld [vmem:[#allocation9 + $0x130] sm:$0xff]
    %v331 = vld [vmem:[#allocation9 + $0x138] sm:$0xff]
    %v332 = vld [vmem:[#allocation9 + $0x140] sm:$0xff]
    %v333 = vld [vmem:[#allocation9 + $0x148] sm:$0xff]
    %v334 = vld [vmem:[#allocation9 + $0x150] sm:$0xff]
    %v335 = vld [vmem:[#allocation9 + $0x158] sm:$0xff]
    %v336 = vld [vmem:[#allocation9 + $0x160] sm:$0xff]
    %v337 = vld [vmem:[#allocation9 + $0x168] sm:$0xff]
    %v338 = vld [vmem:[#allocation9 + $0x170] sm:$0xff]
    %v339 = vld [vmem:[#allocation9 + $0x178] sm:$0xff]
    %v340 = vld [vmem:[#allocation9 + $0x180] sm:$0xff]
    %v341 = vld [vmem:[#allocation9 + $0x188] sm:$0xff]
    %v342 = vld [vmem:[#allocation9 + $0x190] sm:$0xff]
    %v343 = vld [vmem:[#allocation9 + $0x198] sm:$0xff]
    %v344 = vld [vmem:[#allocation9 + $0x1a0] sm:$0xff]
    %v345 = vld [vmem:[#allocation9 + $0x1a8] sm:$0xff]
    %v346 = vld [vmem:[#allocation9 + $0x1b0] sm:$0xff]
    %v347 = vld [vmem:[#allocation9 + $0x1b8] sm:$0xff]
    %v348 = vld [vmem:[#allocation9 + $0x1c0] sm:$0xff]
    %v349 = vld [vmem:[#allocation9 + $0x1c8] sm:$0xff]
    %v350 = vld [vmem:[#allocation9 + $0x1d0] sm:$0xff]
    %v351 = vld [vmem:[#allocation9 + $0x1d8] sm:$0xff]
    %v352 = vld [vmem:[#allocation9 + $0x1e0] sm:$0xff]
    %v353 = vld [vmem:[#allocation9 + $0x1e8] sm:$0xff]
    %v354 = vld [vmem:[#allocation9 + $0x1f0] sm:$0xff]
    %v355 = vld [vmem:[#allocation9 + $0x1f8] sm:$0xff]
    %v356 = vld [vmem:[#allocation2] sm:$0x1]
    %v357 = vld [vmem:[#allocation3] sm:$0x1]
    %358 = vmatprep.subr.mxu0 %v293
    %359 = vmatpush1.msra.mxu0 %v292
    %360 = vmatprep.subr.mxu0 %v297
    %361 = vmatpush1.msra.mxu0 %v296
    %362 = vmatprep.subr.mxu0 %v301
    %363 = vmatpush1.msra.mxu0 %v300
    %364 = vmatprep.subr.mxu0 %v305
    %365 = vmatpush1.msra.mxu0 %v304
    %366 = vmatprep.subr.mxu0 %v309
    %367 = vmatpush1.msra.mxu0 %v308
    %368 = vmatprep.subr.mxu0 %v313
    %369 = vmatpush1.msra.mxu0 %v312
    %370 = vmatprep.subr.mxu0 %v317
    %371 = vmatpush1.msra.mxu0 %v316
    %372 = vmatprep.subr.mxu0 %v321
    %373 = vmatpush1.msra.mxu0 %v320
    %374 = vmatprep.subr.mxu0 %v325
    %375 = vmatpush1.msra.mxu0 %v324
    %376 = vmatprep.subr.mxu0 %v329
    %377 = vmatpush1.msra.mxu0 %v328
    %378 = vmatprep.subr.mxu0 %v333
    %379 = vmatpush1.msra.mxu0 %v332
    %380 = vmatprep.subr.mxu0 %v337
    %381 = vmatpush1.msra.mxu0 %v336
    %382 = vmatprep.subr.mxu0 %v341
    %383 = vmatpush1.msra.mxu0 %v340
    %384 = vmatprep.subr.mxu0 %v345
    %385 = vmatpush1.msra.mxu0 %v344
    %386 = vmatprep.subr.mxu0 %v349
    %387 = vmatpush1.msra.mxu0 %v348
    %388 = vmatprep.subr.mxu0 %v353
    %389 = vmatpush1.msra.mxu0 %v352
    %390 = vmatprep.subr.mxu0 0.0
    %391 = vmatpush1.msra.mxu0 0.0
    %392 = vmatprep.subr.mxu0 0.0
    %393 = vmatpush1.msra.mxu0 0.0
    %394 = vmatprep.subr.mxu0 0.0
    %395 = vmatpush1.msra.mxu0 0.0
    %396 = vmatprep.subr.mxu0 0.0
    %397 = vmatpush1.msra.mxu0 0.0
    %398 = vmatprep.subr.mxu0 0.0
    %399 = vmatpush1.msra.mxu0 0.0
    %400 = vmatprep.subr.mxu0 0.0
    %401 = vmatpush1.msra.mxu0 0.0
    %402 = vmatprep.subr.mxu0 0.0
    %403 = vmatpush1.msra.mxu0 0.0
    %404 = vmatprep.subr.mxu0 0.0
    %405 = vmatpush1.msra.mxu0 0.0
    %406 = vmatprep.subr.mxu0 0.0
    %407 = vmatpush1.msra.mxu0 0.0
    %408 = vmatprep.subr.mxu0 0.0
    %409 = vmatpush1.msra.mxu0 0.0
    %410 = vmatprep.subr.mxu0 0.0
    %411 = vmatpush1.msra.mxu0 0.0
    %412 = vmatprep.subr.mxu0 0.0
    %413 = vmatpush1.msra.mxu0 0.0
    %414 = vmatprep.subr.mxu0 0.0
    %415 = vmatpush1.msra.mxu0 0.0
    %416 = vmatprep.subr.mxu0 0.0
    %417 = vmatpush1.msra.mxu0 0.0
    %418 = vmatprep.subr.mxu0 0.0
    %419 = vmatpush1.msra.mxu0 0.0
    %420 = vmatprep.subr.mxu0 0.0
    %421 = vmatpush1.msra.mxu0 0.0
    %422 = vmatprep.mubr.f32.mxu0 0.0
    %423 = vmatmul.mubr.f32.gmra.mrb[0].mxu0 %v356
    %v424 = vpop.f32.mrb[0].mxu0
    %v425 = vadd.f32 0.0, %v424
    %v426 = vpop.f32.mrb[0].mxu0
    %v427 = vadd.f32 0.0, %v426
    %428 = vdwg.mxu0
    %429 = vmatprep.subr.mxu0 %v295
    %430 = vmatpush1.msra.mxu0 %v294
    %431 = vmatprep.subr.mxu0 %v299
    %432 = vmatpush1.msra.mxu0 %v298
    %433 = vmatprep.subr.mxu0 %v303
    %434 = vmatpush1.msra.mxu0 %v302
    %435 = vmatprep.subr.mxu0 %v307
    %436 = vmatpush1.msra.mxu0 %v306
    %437 = vmatprep.subr.mxu0 %v311
    %438 = vmatpush1.msra.mxu0 %v310
    %439 = vmatprep.subr.mxu0 %v315
    %440 = vmatpush1.msra.mxu0 %v314
    %441 = vmatprep.subr.mxu0 %v319
    %442 = vmatpush1.msra.mxu0 %v318
    %443 = vmatprep.subr.mxu0 %v323
    %444 = vmatpush1.msra.mxu0 %v322
    %445 = vmatprep.subr.mxu0 %v327
    %446 = vmatpush1.msra.mxu0 %v326
    %447 = vmatprep.subr.mxu0 %v331
    %448 = vmatpush1.msra.mxu0 %v330
    %449 = vmatprep.subr.mxu0 %v335
    %450 = vmatpush1.msra.mxu0 %v334
    %451 = vmatprep.subr.mxu0 %v339
    %452 = vmatpush1.msra.mxu0 %v338
    %453 = vmatprep.subr.mxu0 %v343
    %454 = vmatpush1.msra.mxu0 %v342
    %455 = vmatprep.subr.mxu0 %v347
    %456 = vmatpush1.msra.mxu0 %v346
    %457 = vmatprep.subr.mxu0 %v351
    %458 = vmatpush1.msra.mxu0 %v350
    %459 = vmatprep.subr.mxu0 %v355
    %460 = vmatpush1.msra.mxu0 %v354
    %461 = vmatprep.subr.mxu0 0.0
    %462 = vmatpush1.msra.mxu0 0.0
    %463 = vmatprep.subr.mxu0 0.0
    %464 = vmatpush1.msra.mxu0 0.0
    %465 = vmatprep.subr.mxu0 0.0
    %466 = vmatpush1.msra.mxu0 0.0
    %467 = vmatprep.subr.mxu0 0.0
    %468 = vmatpush1.msra.mxu0 0.0
    %469 = vmatprep.subr.mxu0 0.0
    %470 = vmatpush1.msra.mxu0 0.0
    %471 = vmatprep.subr.mxu0 0.0
    %472 = vmatpush1.msra.mxu0 0.0
    %473 = vmatprep.subr.mxu0 0.0
    %474 = vmatpush1.msra.mxu0 0.0
    %475 = vmatprep.subr.mxu0 0.0
    %476 = vmatpush1.msra.mxu0 0.0
    %477 = vmatprep.subr.mxu0 0.0
    %478 = vmatpush1.msra.mxu0 0.0
    %479 = vmatprep.subr.mxu0 0.0
    %480 = vmatpush1.msra.mxu0 0.0
    %481 = vmatprep.subr.mxu0 0.0
    %482 = vmatpush1.msra.mxu0 0.0
    %483 = vmatprep.subr.mxu0 0.0
    %484 = vmatpush1.msra.mxu0 0.0
    %485 = vmatprep.subr.mxu0 0.0
    %486 = vmatpush1.msra.mxu0 0.0
    %487 = vmatprep.subr.mxu0 0.0
    %488 = vmatpush1.msra.mxu0 0.0
    %489 = vmatprep.subr.mxu0 0.0
    %490 = vmatpush1.msra.mxu0 0.0
    %491 = vmatprep.subr.mxu0 0.0
    %492 = vmatpush1.msra.mxu0 0.0
    %493 = vmatprep.mubr.f32.mxu0 0.0
    %494 = vmatmul.mubr.f32.gmra.mrb[0].mxu0 %v356
    %v495 = vpop.f32.mrb[0].mxu0
    %v496 = vadd.f32 0.0, %v495
    %v497 = vpop.f32.mrb[0].mxu0
    %v498 = vadd.f32 0.0, %v497
    %499 = vdwg.mxu0
    %v500 = vadd.f32 %v217, %v425
    %v501 = vadd.f32 %v219, %v427
    %v502 = vadd.f32 %v288, %v496
    %v503 = vadd.f32 %v290, %v498
    %v504 = vmul.f32 %v500, 0.5
    %v505 = vtanh.pop %v504
    %v506 = vmul.f32 %v505, 0.5
    %v507 = vadd.f32 %v506, 0.5
    %v508 = vmul.f32 %v501, 0.5
    %v509 = vtanh.pop %v508
    %v510 = vmul.f32 %v509, 0.5
    %v511 = vadd.f32 %v510, 0.5
    %v512 = vtanh.pop %v502
    %v513 = vmul.f32 %v503, 0.5
    %v514 = vtanh.pop %v513
    %v515 = vmul.f32 %v514, 0.5
    %v516 = vadd.f32 %v515, 0.5
    %v517 = vmul.f32 %v511, %v357
    %v518 = vmul.f32 %v507, %v512
    %v519 = vadd.f32 %v517, %v518
    %v520 = vtanh.pop %v519
    %v521 = vmul.f32 %v516, %v520
    %522 = vmatprep.subr.mxu0 %v293
    %523 = vmatpush1.msra.mxu0 %v292
    %524 = vmatprep.subr.mxu0 %v297
    %525 = vmatpush1.msra.mxu0 %v296
    %526 = vmatprep.subr.mxu0 %v301
    %527 = vmatpush1.msra.mxu0 %v300
    %528 = vmatprep.subr.mxu0 %v305
    %529 = vmatpush1.msra.mxu0 %v304
    %530 = vmatprep.subr.mxu0 %v309
    %531 = vmatpush1.msra.mxu0 %v308
    %532 = vmatprep.subr.mxu0 %v313
    %533 = vmatpush1.msra.mxu0 %v312
    %534 = vmatprep.subr.mxu0 %v317
    %535 = vmatpush1.msra.mxu0 %v316
    %536 = vmatprep.subr.mxu0 %v321
    %537 = vmatpush1.msra.mxu0 %v320
    %538 = vmatprep.subr.mxu0 %v325
    %539 = vmatpush1.msra.mxu0 %v324
    %540 = vmatprep.subr.mxu0 %v329
    %541 = vmatpush1.msra.mxu0 %v328
    %542 = vmatprep.subr.mxu0 %v333
    %543 = vmatpush1.msra.mxu0 %v332
    %544 = vmatprep.subr.mxu0 %v337
    %545 = vmatpush1.msra.mxu0 %v336
    %546 = vmatprep.subr.mxu0 %v341
    %547 = vmatpush1.msra.mxu0 %v340
    %548 = vmatprep.subr.mxu0 %v345
    %549 = vmatpush1.msra.mxu0 %v344
    %550 = vmatprep.subr.mxu0 %v349
    %551 = vmatpush1.msra.mxu0 %v348
    %552 = vmatprep.subr.mxu0 %v353
    %553 = vmatpush1.msra.mxu0 %v352
    %554 = vmatprep.subr.mxu0 0.0
    %555 = vmatpush1.msra.mxu0 0.0
    %556 = vmatprep.subr.mxu0 0.0
    %557 = vmatpush1.msra.mxu0 0.0
    %558 = vmatprep.subr.mxu0 0.0
    %559 = vmatpush1.msra.mxu0 0.0
    %560 = vmatprep.subr.mxu0 0.0
    %561 = vmatpush1.msra.mxu0 0.0
    %562 = vmatprep.subr.mxu0 0.0
    %563 = vmatpush1.msra.mxu0 0.0
    %564 = vmatprep.subr.mxu0 0.0
    %565 = vmatpush1.msra.mxu0 0.0
    %566 = vmatprep.subr.mxu0 0.0
    %567 = vmatpush1.msra.mxu0 0.0
    %568 = vmatprep.subr.mxu0 0.0
    %569 = vmatpush1.msra.mxu0 0.0
    %570 = vmatprep.subr.mxu0 0.0
    %571 = vmatpush1.msra.mxu0 0.0
    %572 = vmatprep.subr.mxu0 0.0
    %573 = vmatpush1.msra.mxu0 0.0
    %574 = vmatprep.subr.mxu0 0.0
    %575 = vmatpush1.msra.mxu0 0.0
    %576 = vmatprep.subr.mxu0 0.0
    %577 = vmatpush1.msra.mxu0 0.0
    %578 = vmatprep.subr.mxu0 0.0
    %579 = vmatpush1.msra.mxu0 0.0
    %580 = vmatprep.subr.mxu0 0.0
    %581 = vmatpush1.msra.mxu0 0.0
    %582 = vmatprep.subr.mxu0 0.0
    %583 = vmatpush1.msra.mxu0 0.0
    %584 = vmatprep.subr.mxu0 0.0
    %585 = vmatpush1.msra.mxu0 0.0
    %586 = vmatprep.mubr.f32.mxu0 0.0
    %587 = vmatmul.mubr.f32.gmra.mrb[0].mxu0 %v521
    %v588 = vpop.f32.mrb[0].mxu0
    %v589 = vadd.f32 0.0, %v588
    %v590 = vpop.f32.mrb[0].mxu0
    %v591 = vadd.f32 0.0, %v590
    %592 = vdwg.mxu0
    %593 = vmatprep.subr.mxu0 %v295
    %594 = vmatpush1.msra.mxu0 %v294
    %595 = vmatprep.subr.mxu0 %v299
    %596 = vmatpush1.msra.mxu0 %v298
    %597 = vmatprep.subr.mxu0 %v303
    %598 = vmatpush1.msra.mxu0 %v302
    %599 = vmatprep.subr.mxu0 %v307
    %600 = vmatpush1.msra.mxu0 %v306
    %601 = vmatprep.subr.mxu0 %v311
    %602 = vmatpush1.msra.mxu0 %v310
    %603 = vmatprep.subr.mxu0 %v315
    %604 = vmatpush1.msra.mxu0 %v314
    %605 = vmatprep.subr.mxu0 %v319
    %606 = vmatpush1.msra.mxu0 %v318
    %607 = vmatprep.subr.mxu0 %v323
    %608 = vmatpush1.msra.mxu0 %v322
    %609 = vmatprep.subr.mxu0 %v327
    %610 = vmatpush1.msra.mxu0 %v326
    %611 = vmatprep.subr.mxu0 %v331
    %612 = vmatpush1.msra.mxu0 %v330
    %613 = vmatprep.subr.mxu0 %v335
    %614 = vmatpush1.msra.mxu0 %v334
    %615 = vmatprep.subr.mxu0 %v339
    %616 = vmatpush1.msra.mxu0 %v338
    %617 = vmatprep.subr.mxu0 %v343
    %618 = vmatpush1.msra.mxu0 %v342
    %619 = vmatprep.subr.mxu0 %v347
    %620 = vmatpush1.msra.mxu0 %v346
    %621 = vmatprep.subr.mxu0 %v351
    %622 = vmatpush1.msra.mxu0 %v350
    %623 = vmatprep.subr.mxu0 %v355
    %624 = vmatpush1.msra.mxu0 %v354
    %625 = vmatprep.subr.mxu0 0.0
    %626 = vmatpush1.msra.mxu0 0.0
    %627 = vmatprep.subr.mxu0 0.0
    %628 = vmatpush1.msra.mxu0 0.0
    %629 = vmatprep.subr.mxu0 0.0
    %630 = vmatpush1.msra.mxu0 0.0
    %631 = vmatprep.subr.mxu0 0.0
    %632 = vmatpush1.msra.mxu0 0.0
    %633 = vmatprep.subr.mxu0 0.0
    %634 = vmatpush1.msra.mxu0 0.0
    %635 = vmatprep.subr.mxu0 0.0
    %636 = vmatpush1.msra.mxu0 0.0
    %637 = vmatprep.subr.mxu0 0.0
    %638 = vmatpush1.msra.mxu0 0.0
    %639 = vmatprep.subr.mxu0 0.0
    %640 = vmatpush1.msra.mxu0 0.0
    %641 = vmatprep.subr.mxu0 0.0
    %642 = vmatpush1.msra.mxu0 0.0
    %643 = vmatprep.subr.mxu0 0.0
    %644 = vmatpush1.msra.mxu0 0.0
    %645 = vmatprep.subr.mxu0 0.0
    %646 = vmatpush1.msra.mxu0 0.0
    %647 = vmatprep.subr.mxu0 0.0
    %648 = vmatpush1.msra.mxu0 0.0
    %649 = vmatprep.subr.mxu0 0.0
    %650 = vmatpush1.msra.mxu0 0.0
    %651 = vmatprep.subr.mxu0 0.0
    %652 = vmatpush1.msra.mxu0 0.0
    %653 = vmatprep.subr.mxu0 0.0
    %654 = vmatpush1.msra.mxu0 0.0
    %655 = vmatprep.subr.mxu0 0.0
    %656 = vmatpush1.msra.mxu0 0.0
    %657 = vmatprep.mubr.f32.mxu0 0.0
    %658 = vmatmul.mubr.f32.gmra.mrb[0].mxu0 %v521
    %v659 = vpop.f32.mrb[0].mxu0
    %v660 = vadd.f32 0.0, %v659
    %v661 = vpop.f32.mrb[0].mxu0
    %v662 = vadd.f32 0.0, %v661
    %663 = vdwg.mxu0
    %v668 = vrot.slane %v589, 7
    %v669 = vrot.slane %v591, 7
    %v670 = vrot.slane %v660, 7
    %v671 = vrot.slane %v662, 7
    %v676 = vadd.f32 %v217, %v668
    %v677 = vadd.f32 %v219, %v669
    %v678 = vadd.f32 %v288, %v670
    %v679 = vadd.f32 %v290, %v671
    %v680 = vmul.f32 %v676, 0.5
    %v681 = vtanh.pop %v680
    %v682 = vmul.f32 %v681, 0.5
    %v683 = vadd.f32 %v682, 0.5
    %v684 = vmul.f32 %v677, 0.5
    %v685 = vtanh.pop %v684
    %v686 = vmul.f32 %v685, 0.5
    %v687 = vadd.f32 %v686, 0.5
    %v688 = vtanh.pop %v678
    %v689 = vmul.f32 %v679, 0.5
    %v690 = vtanh.pop %v689
    %v691 = vmul.f32 %v690, 0.5
    %v692 = vadd.f32 %v691, 0.5
    %v694 = vrot.slane %v519, 7
    %v696 = vmul.f32 %v687, %v694
    %v697 = vmul.f32 %v683, %v688
    %v698 = vadd.f32 %v696, %v697
    %v699 = vtanh.pop %v698
    %v700 = vmul.f32 %v692, %v699
    %v702 = vrot.slane %v700, 1
    %704 = vmatprep.subr.mxu0 %v293
    %705 = vmatpush1.msra.mxu0 %v292
    %706 = vmatprep.subr.mxu0 %v297
    %707 = vmatpush1.msra.mxu0 %v296
    %708 = vmatprep.subr.mxu0 %v301
    %709 = vmatpush1.msra.mxu0 %v300
    %710 = vmatprep.subr.mxu0 %v305
    %711 = vmatpush1.msra.mxu0 %v304
    %712 = vmatprep.subr.mxu0 %v309
    %713 = vmatpush1.msra.mxu0 %v308
    %714 = vmatprep.subr.mxu0 %v313
    %715 = vmatpush1.msra.mxu0 %v312
    %716 = vmatprep.subr.mxu0 %v317
    %717 = vmatpush1.msra.mxu0 %v316
    %718 = vmatprep.subr.mxu0 %v321
    %719 = vmatpush1.msra.mxu0 %v320
    %720 = vmatprep.subr.mxu0 %v325
    %721 = vmatpush1.msra.mxu0 %v324
    %722 = vmatprep.subr.mxu0 %v329
    %723 = vmatpush1.msra.mxu0 %v328
    %724 = vmatprep.subr.mxu0 %v333
    %725 = vmatpush1.msra.mxu0 %v332
    %726 = vmatprep.subr.mxu0 %v337
    %727 = vmatpush1.msra.mxu0 %v336
    %728 = vmatprep.subr.mxu0 %v341
    %729 = vmatpush1.msra.mxu0 %v340
    %730 = vmatprep.subr.mxu0 %v345
    %731 = vmatpush1.msra.mxu0 %v344
    %732 = vmatprep.subr.mxu0 %v349
    %733 = vmatpush1.msra.mxu0 %v348
    %734 = vmatprep.subr.mxu0 %v353
    %735 = vmatpush1.msra.mxu0 %v352
    %736 = vmatprep.subr.mxu0 0.0
    %737 = vmatpush1.msra.mxu0 0.0
    %738 = vmatprep.subr.mxu0 0.0
    %739 = vmatpush1.msra.mxu0 0.0
    %740 = vmatprep.subr.mxu0 0.0
    %741 = vmatpush1.msra.mxu0 0.0
    %742 = vmatprep.subr.mxu0 0.0
    %743 = vmatpush1.msra.mxu0 0.0
    %744 = vmatprep.subr.mxu0 0.0
    %745 = vmatpush1.msra.mxu0 0.0
    %746 = vmatprep.subr.mxu0 0.0
    %747 = vmatpush1.msra.mxu0 0.0
    %748 = vmatprep.subr.mxu0 0.0
    %749 = vmatpush1.msra.mxu0 0.0
    %750 = vmatprep.subr.mxu0 0.0
    %751 = vmatpush1.msra.mxu0 0.0
    %752 = vmatprep.subr.mxu0 0.0
    %753 = vmatpush1.msra.mxu0 0.0
    %754 = vmatprep.subr.mxu0 0.0
    %755 = vmatpush1.msra.mxu0 0.0
    %756 = vmatprep.subr.mxu0 0.0
    %757 = vmatpush1.msra.mxu0 0.0
    %758 = vmatprep.subr.mxu0 0.0
    %759 = vmatpush1.msra.mxu0 0.0
    %760 = vmatprep.subr.mxu0 0.0
    %761 = vmatpush1.msra.mxu0 0.0
    %762 = vmatprep.subr.mxu0 0.0
    %763 = vmatpush1.msra.mxu0 0.0
    %764 = vmatprep.subr.mxu0 0.0
    %765 = vmatpush1.msra.mxu0 0.0
    %766 = vmatprep.subr.mxu0 0.0
    %767 = vmatpush1.msra.mxu0 0.0
    %768 = vmatprep.mubr.f32.mxu0 0.0
    %769 = vmatmul.mubr.f32.gmra.mrb[0].mxu0 %v702
    %v770 = vpop.f32.mrb[0].mxu0
    %v771 = vadd.f32 0.0, %v770
    %v772 = vpop.f32.mrb[0].mxu0
    %v773 = vadd.f32 0.0, %v772
    %774 = vdwg.mxu0
    %775 = vmatprep.subr.mxu0 %v295
    %776 = vmatpush1.msra.mxu0 %v294
    %777 = vmatprep.subr.mxu0 %v299
    %778 = vmatpush1.msra.mxu0 %v298
    %779 = vmatprep.subr.mxu0 %v303
    %780 = vmatpush1.msra.mxu0 %v302
    %781 = vmatprep.subr.mxu0 %v307
    %782 = vmatpush1.msra.mxu0 %v306
    %783 = vmatprep.subr.mxu0 %v311
    %784 = vmatpush1.msra.mxu0 %v310
    %785 = vmatprep.subr.mxu0 %v315
    %786 = vmatpush1.msra.mxu0 %v314
    %787 = vmatprep.subr.mxu0 %v319
    %788 = vmatpush1.msra.mxu0 %v318
    %789 = vmatprep.subr.mxu0 %v323
    %790 = vmatpush1.msra.mxu0 %v322
    %791 = vmatprep.subr.mxu0 %v327
    %792 = vmatpush1.msra.mxu0 %v326
    %793 = vmatprep.subr.mxu0 %v331
    %794 = vmatpush1.msra.mxu0 %v330
    %795 = vmatprep.subr.mxu0 %v335
    %796 = vmatpush1.msra.mxu0 %v334
    %797 = vmatprep.subr.mxu0 %v339
    %798 = vmatpush1.msra.mxu0 %v338
    %799 = vmatprep.subr.mxu0 %v343
    %800 = vmatpush1.msra.mxu0 %v342
    %801 = vmatprep.subr.mxu0 %v347
    %802 = vmatpush1.msra.mxu0 %v346
    %803 = vmatprep.subr.mxu0 %v351
    %804 = vmatpush1.msra.mxu0 %v350
    %805 = vmatprep.subr.mxu0 %v355
    %806 = vmatpush1.msra.mxu0 %v354
    %807 = vmatprep.subr.mxu0 0.0
    %808 = vmatpush1.msra.mxu0 0.0
    %809 = vmatprep.subr.mxu0 0.0
    %810 = vmatpush1.msra.mxu0 0.0
    %811 = vmatprep.subr.mxu0 0.0
    %812 = vmatpush1.msra.mxu0 0.0
    %813 = vmatprep.subr.mxu0 0.0
    %814 = vmatpush1.msra.mxu0 0.0
    %815 = vmatprep.subr.mxu0 0.0
    %816 = vmatpush1.msra.mxu0 0.0
    %817 = vmatprep.subr.mxu0 0.0
    %818 = vmatpush1.msra.mxu0 0.0
    %819 = vmatprep.subr.mxu0 0.0
    %820 = vmatpush1.msra.mxu0 0.0
    %821 = vmatprep.subr.mxu0 0.0
    %822 = vmatpush1.msra.mxu0 0.0
    %823 = vmatprep.subr.mxu0 0.0
    %824 = vmatpush1.msra.mxu0 0.0
    %825 = vmatprep.subr.mxu0 0.0
    %826 = vmatpush1.msra.mxu0 0.0
    %827 = vmatprep.subr.mxu0 0.0
    %828 = vmatpush1.msra.mxu0 0.0
    %829 = vmatprep.subr.mxu0 0.0
    %830 = vmatpush1.msra.mxu0 0.0
    %831 = vmatprep.subr.mxu0 0.0
    %832 = vmatpush1.msra.mxu0 0.0
    %833 = vmatprep.subr.mxu0 0.0
    %834 = vmatpush1.msra.mxu0 0.0
    %835 = vmatprep.subr.mxu0 0.0
    %836 = vmatpush1.msra.mxu0 0.0
    %837 = vmatprep.subr.mxu0 0.0
    %838 = vmatpush1.msra.mxu0 0.0
    %839 = vmatprep.mubr.f32.mxu0 0.0
    %840 = vmatmul.mubr.f32.gmra.mrb[0].mxu0 %v702
    %v841 = vpop.f32.mrb[0].mxu0
    %v842 = vadd.f32 0.0, %v841
    %v843 = vpop.f32.mrb[0].mxu0
    %v844 = vadd.f32 0.0, %v843
    %845 = vdwg.mxu0
    %v850 = vrot.slane %v771, 6
    %v851 = vrot.slane %v773, 6
    %v852 = vrot.slane %v842, 6
    %v853 = vrot.slane %v844, 6
    %v858 = vadd.f32 %v217, %v850
    %v859 = vadd.f32 %v219, %v851
    %v860 = vadd.f32 %v288, %v852
    %v861 = vadd.f32 %v290, %v853
    %v862 = vmul.f32 %v858, 0.5
    %v863 = vtanh.pop %v862
    %v864 = vmul.f32 %v863, 0.5
    %v865 = vadd.f32 %v864, 0.5
    %v866 = vmul.f32 %v859, 0.5
    %v867 = vtanh.pop %v866
    %v868 = vmul.f32 %v867, 0.5
    %v869 = vadd.f32 %v868, 0.5
    %v870 = vtanh.pop %v860
    %v871 = vmul.f32 %v861, 0.5
    %v872 = vtanh.pop %v871
    %v873 = vmul.f32 %v872, 0.5
    %v874 = vadd.f32 %v873, 0.5
    %v876 = vrot.slane %v698, 7
    %v878 = vmul.f32 %v869, %v876
    %v879 = vmul.f32 %v865, %v870
    %v880 = vadd.f32 %v878, %v879
    %v881 = vtanh.pop %v880
    %v882 = vmul.f32 %v874, %v881
    %v884 = vrot.slane %v882, 2
    %886 = vmatprep.subr.mxu0 %v293
    %887 = vmatpush1.msra.mxu0 %v292
    %888 = vmatprep.subr.mxu0 %v297
    %889 = vmatpush1.msra.mxu0 %v296
    %890 = vmatprep.subr.mxu0 %v301
    %891 = vmatpush1.msra.mxu0 %v300
    %892 = vmatprep.subr.mxu0 %v305
    %893 = vmatpush1.msra.mxu0 %v304
    %894 = vmatprep.subr.mxu0 %v309
    %895 = vmatpush1.msra.mxu0 %v308
    %896 = vmatprep.subr.mxu0 %v313
    %897 = vmatpush1.msra.mxu0 %v312
    %898 = vmatprep.subr.mxu0 %v317
    %899 = vmatpush1.msra.mxu0 %v316
    %900 = vmatprep.subr.mxu0 %v321
    %901 = vmatpush1.msra.mxu0 %v320
    %902 = vmatprep.subr.mxu0 %v325
    %903 = vmatpush1.msra.mxu0 %v324
    %904 = vmatprep.subr.mxu0 %v329
    %905 = vmatpush1.msra.mxu0 %v328
    %906 = vmatprep.subr.mxu0 %v333
    %907 = vmatpush1.msra.mxu0 %v332
    %908 = vmatprep.subr.mxu0 %v337
    %909 = vmatpush1.msra.mxu0 %v336
    %910 = vmatprep.subr.mxu0 %v341
    %911 = vmatpush1.msra.mxu0 %v340
    %912 = vmatprep.subr.mxu0 %v345
    %913 = vmatpush1.msra.mxu0 %v344
    %914 = vmatprep.subr.mxu0 %v349
    %915 = vmatpush1.msra.mxu0 %v348
    %916 = vmatprep.subr.mxu0 %v353
    %917 = vmatpush1.msra.mxu0 %v352
    %918 = vmatprep.subr.mxu0 0.0
    %919 = vmatpush1.msra.mxu0 0.0
    %920 = vmatprep.subr.mxu0 0.0
    %921 = vmatpush1.msra.mxu0 0.0
    %922 = vmatprep.subr.mxu0 0.0
    %923 = vmatpush1.msra.mxu0 0.0
    %924 = vmatprep.subr.mxu0 0.0
    %925 = vmatpush1.msra.mxu0 0.0
    %926 = vmatprep.subr.mxu0 0.0
    %927 = vmatpush1.msra.mxu0 0.0
    %928 = vmatprep.subr.mxu0 0.0
    %929 = vmatpush1.msra.mxu0 0.0
    %930 = vmatprep.subr.mxu0 0.0
    %931 = vmatpush1.msra.mxu0 0.0
    %932 = vmatprep.subr.mxu0 0.0
    %933 = vmatpush1.msra.mxu0 0.0
    %934 = vmatprep.subr.mxu0 0.0
    %935 = vmatpush1.msra.mxu0 0.0
    %936 = vmatprep.subr.mxu0 0.0
    %937 = vmatpush1.msra.mxu0 0.0
    %938 = vmatprep.subr.mxu0 0.0
    %939 = vmatpush1.msra.mxu0 0.0
    %940 = vmatprep.subr.mxu0 0.0
    %941 = vmatpush1.msra.mxu0 0.0
    %942 = vmatprep.subr.mxu0 0.0
    %943 = vmatpush1.msra.mxu0 0.0
    %944 = vmatprep.subr.mxu0 0.0
    %945 = vmatpush1.msra.mxu0 0.0
    %946 = vmatprep.subr.mxu0 0.0
    %947 = vmatpush1.msra.mxu0 0.0
    %948 = vmatprep.subr.mxu0 0.0
    %949 = vmatpush1.msra.mxu0 0.0
    %950 = vmatprep.mubr.f32.mxu0 0.0
    %951 = vmatmul.mubr.f32.gmra.mrb[0].mxu0 %v884
    %v952 = vpop.f32.mrb[0].mxu0
    %v953 = vadd.f32 0.0, %v952
    %v954 = vpop.f32.mrb[0].mxu0
    %v955 = vadd.f32 0.0, %v954
    %956 = vdwg.mxu0
    %957 = vmatprep.subr.mxu0 %v295
    %958 = vmatpush1.msra.mxu0 %v294
    %959 = vmatprep.subr.mxu0 %v299
    %960 = vmatpush1.msra.mxu0 %v298
    %961 = vmatprep.subr.mxu0 %v303
    %962 = vmatpush1.msra.mxu0 %v302
    %963 = vmatprep.subr.mxu0 %v307
    %964 = vmatpush1.msra.mxu0 %v306
    %965 = vmatprep.subr.mxu0 %v311
    %966 = vmatpush1.msra.mxu0 %v310
    %967 = vmatprep.subr.mxu0 %v315
    %968 = vmatpush1.msra.mxu0 %v314
    %969 = vmatprep.subr.mxu0 %v319
    %970 = vmatpush1.msra.mxu0 %v318
    %971 = vmatprep.subr.mxu0 %v323
    %972 = vmatpush1.msra.mxu0 %v322
    %973 = vmatprep.subr.mxu0 %v327
    %974 = vmatpush1.msra.mxu0 %v326
    %975 = vmatprep.subr.mxu0 %v331
    %976 = vmatpush1.msra.mxu0 %v330
    %977 = vmatprep.subr.mxu0 %v335
    %978 = vmatpush1.msra.mxu0 %v334
    %979 = vmatprep.subr.mxu0 %v339
    %980 = vmatpush1.msra.mxu0 %v338
    %981 = vmatprep.subr.mxu0 %v343
    %982 = vmatpush1.msra.mxu0 %v342
    %983 = vmatprep.subr.mxu0 %v347
    %984 = vmatpush1.msra.mxu0 %v346
    %985 = vmatprep.subr.mxu0 %v351
    %986 = vmatpush1.msra.mxu0 %v350
    %987 = vmatprep.subr.mxu0 %v355
    %988 = vmatpush1.msra.mxu0 %v354
    %989 = vmatprep.subr.mxu0 0.0
    %990 = vmatpush1.msra.mxu0 0.0
    %991 = vmatprep.subr.mxu0 0.0
    %992 = vmatpush1.msra.mxu0 0.0
    %993 = vmatprep.subr.mxu0 0.0
    %994 = vmatpush1.msra.mxu0 0.0
    %995 = vmatprep.subr.mxu0 0.0
    %996 = vmatpush1.msra.mxu0 0.0
    %997 = vmatprep.subr.mxu0 0.0
    %998 = vmatpush1.msra.mxu0 0.0
    %999 = vmatprep.subr.mxu0 0.0
    %1000 = vmatpush1.msra.mxu0 0.0
    %1001 = vmatprep.subr.mxu0 0.0
    %1002 = vmatpush1.msra.mxu0 0.0
    %1003 = vmatprep.subr.mxu0 0.0
    %1004 = vmatpush1.msra.mxu0 0.0
    %1005 = vmatprep.subr.mxu0 0.0
    %1006 = vmatpush1.msra.mxu0 0.0
    %1007 = vmatprep.subr.mxu0 0.0
    %1008 = vmatpush1.msra.mxu0 0.0
    %1009 = vmatprep.subr.mxu0 0.0
    %1010 = vmatpush1.msra.mxu0 0.0
    %1011 = vmatprep.subr.mxu0 0.0
    %1012 = vmatpush1.msra.mxu0 0.0
    %1013 = vmatprep.subr.mxu0 0.0
    %1014 = vmatpush1.msra.mxu0 0.0
    %1015 = vmatprep.subr.mxu0 0.0
    %1016 = vmatpush1.msra.mxu0 0.0
    %1017 = vmatprep.subr.mxu0 0.0
    %1018 = vmatpush1.msra.mxu0 0.0
    %1019 = vmatprep.subr.mxu0 0.0
    %1020 = vmatpush1.msra.mxu0 0.0
    %1021 = vmatprep.mubr.f32.mxu0 0.0
    %1022 = vmatmul.mubr.f32.gmra.mrb[0].mxu0 %v884
    %v1023 = vpop.f32.mrb[0].mxu0
    %v1024 = vadd.f32 0.0, %v1023
    %v1025 = vpop.f32.mrb[0].mxu0
    %v1026 = vadd.f32 0.0, %v1025
    %1027 = vdwg.mxu0
    %v1032 = vrot.slane %v953, 5
    %v1033 = vrot.slane %v955, 5
    %v1034 = vrot.slane %v1024, 5
    %v1035 = vrot.slane %v1026, 5
    %v1040 = vadd.f32 %v217, %v1032
    %v1041 = vadd.f32 %v219, %v1033
    %v1042 = vadd.f32 %v288, %v1034
    %v1043 = vadd.f32 %v290, %v1035
    %v1044 = vmul.f32 %v1040, 0.5
    %v1045 = vtanh.pop %v1044
    %v1046 = vmul.f32 %v1045, 0.5
    %v1047 = vadd.f32 %v1046, 0.5
    %v1048 = vmul.f32 %v1041, 0.5
    %v1049 = vtanh.pop %v1048
    %v1050 = vmul.f32 %v1049, 0.5
    %v1051 = vadd.f32 %v1050, 0.5
    %v1052 = vtanh.pop %v1042
    %v1053 = vmul.f32 %v1043, 0.5
    %v1054 = vtanh.pop %v1053
    %v1055 = vmul.f32 %v1054, 0.5
    %v1056 = vadd.f32 %v1055, 0.5
    %v1058 = vrot.slane %v880, 7
    %v1060 = vmul.f32 %v1051, %v1058
    %v1061 = vmul.f32 %v1047, %v1052
    %v1062 = vadd.f32 %v1060, %v1061
    %v1063 = vtanh.pop %v1062
    %v1064 = vmul.f32 %v1056, %v1063
    %v1066 = vrot.slane %v1064, 3
    %1068 = vmatprep.subr.mxu0 %v293
    %1069 = vmatpush1.msra.mxu0 %v292
    %1070 = vmatprep.subr.mxu0 %v297
    %1071 = vmatpush1.msra.mxu0 %v296
    %1072 = vmatprep.subr.mxu0 %v301
    %1073 = vmatpush1.msra.mxu0 %v300
    %1074 = vmatprep.subr.mxu0 %v305
    %1075 = vmatpush1.msra.mxu0 %v304
    %1076 = vmatprep.subr.mxu0 %v309
    %1077 = vmatpush1.msra.mxu0 %v308
    %1078 = vmatprep.subr.mxu0 %v313
    %1079 = vmatpush1.msra.mxu0 %v312
    %1080 = vmatprep.subr.mxu0 %v317
    %1081 = vmatpush1.msra.mxu0 %v316
    %1082 = vmatprep.subr.mxu0 %v321
    %1083 = vmatpush1.msra.mxu0 %v320
    %1084 = vmatprep.subr.mxu0 %v325
    %1085 = vmatpush1.msra.mxu0 %v324
    %1086 = vmatprep.subr.mxu0 %v329
    %1087 = vmatpush1.msra.mxu0 %v328
    %1088 = vmatprep.subr.mxu0 %v333
    %1089 = vmatpush1.msra.mxu0 %v332
    %1090 = vmatprep.subr.mxu0 %v337
    %1091 = vmatpush1.msra.mxu0 %v336
    %1092 = vmatprep.subr.mxu0 %v341
    %1093 = vmatpush1.msra.mxu0 %v340
    %1094 = vmatprep.subr.mxu0 %v345
    %1095 = vmatpush1.msra.mxu0 %v344
    %1096 = vmatprep.subr.mxu0 %v349
    %1097 = vmatpush1.msra.mxu0 %v348
    %1098 = vmatprep.subr.mxu0 %v353
    %1099 = vmatpush1.msra.mxu0 %v352
    %1100 = vmatprep.subr.mxu0 0.0
    %1101 = vmatpush1.msra.mxu0 0.0
    %1102 = vmatprep.subr.mxu0 0.0
    %1103 = vmatpush1.msra.mxu0 0.0
    %1104 = vmatprep.subr.mxu0 0.0
    %1105 = vmatpush1.msra.mxu0 0.0
    %1106 = vmatprep.subr.mxu0 0.0
    %1107 = vmatpush1.msra.mxu0 0.0
    %1108 = vmatprep.subr.mxu0 0.0
    %1109 = vmatpush1.msra.mxu0 0.0
    %1110 = vmatprep.subr.mxu0 0.0
    %1111 = vmatpush1.msra.mxu0 0.0
    %1112 = vmatprep.subr.mxu0 0.0
    %1113 = vmatpush1.msra.mxu0 0.0
    %1114 = vmatprep.subr.mxu0 0.0
    %1115 = vmatpush1.msra.mxu0 0.0
    %1116 = vmatprep.subr.mxu0 0.0
    %1117 = vmatpush1.msra.mxu0 0.0
    %1118 = vmatprep.subr.mxu0 0.0
    %1119 = vmatpush1.msra.mxu0 0.0
    %1120 = vmatprep.subr.mxu0 0.0
    %1121 = vmatpush1.msra.mxu0 0.0
    %1122 = vmatprep.subr.mxu0 0.0
    %1123 = vmatpush1.msra.mxu0 0.0
    %1124 = vmatprep.subr.mxu0 0.0
    %1125 = vmatpush1.msra.mxu0 0.0
    %1126 = vmatprep.subr.mxu0 0.0
    %1127 = vmatpush1.msra.mxu0 0.0
    %1128 = vmatprep.subr.mxu0 0.0
    %1129 = vmatpush1.msra.mxu0 0.0
    %1130 = vmatprep.subr.mxu0 0.0
    %1131 = vmatpush1.msra.mxu0 0.0
    %1132 = vmatprep.mubr.f32.mxu0 0.0
    %1133 = vmatmul.mubr.f32.gmra.mrb[0].mxu0 %v1066
    %v1134 = vpop.f32.mrb[0].mxu0
    %v1135 = vadd.f32 0.0, %v1134
    %v1136 = vpop.f32.mrb[0].mxu0
    %v1137 = vadd.f32 0.0, %v1136
    %1138 = vdwg.mxu0
    %1139 = vmatprep.subr.mxu0 %v295
    %1140 = vmatpush1.msra.mxu0 %v294
    %1141 = vmatprep.subr.mxu0 %v299
    %1142 = vmatpush1.msra.mxu0 %v298
    %1143 = vmatprep.subr.mxu0 %v303
    %1144 = vmatpush1.msra.mxu0 %v302
    %1145 = vmatprep.subr.mxu0 %v307
    %1146 = vmatpush1.msra.mxu0 %v306
    %1147 = vmatprep.subr.mxu0 %v311
    %1148 = vmatpush1.msra.mxu0 %v310
    %1149 = vmatprep.subr.mxu0 %v315
    %1150 = vmatpush1.msra.mxu0 %v314
    %1151 = vmatprep.subr.mxu0 %v319
    %1152 = vmatpush1.msra.mxu0 %v318
    %1153 = vmatprep.subr.mxu0 %v323
    %1154 = vmatpush1.msra.mxu0 %v322
    %1155 = vmatprep.subr.mxu0 %v327
    %1156 = vmatpush1.msra.mxu0 %v326
    %1157 = vmatprep.subr.mxu0 %v331
    %1158 = vmatpush1.msra.mxu0 %v330
    %1159 = vmatprep.subr.mxu0 %v335
    %1160 = vmatpush1.msra.mxu0 %v334
    %1161 = vmatprep.subr.mxu0 %v339
    %1162 = vmatpush1.msra.mxu0 %v338
    %1163 = vmatprep.subr.mxu0 %v343
    %1164 = vmatpush1.msra.mxu0 %v342
    %1165 = vmatprep.subr.mxu0 %v347
    %1166 = vmatpush1.msra.mxu0 %v346
    %1167 = vmatprep.subr.mxu0 %v351
    %1168 = vmatpush1.msra.mxu0 %v350
    %1169 = vmatprep.subr.mxu0 %v355
    %1170 = vmatpush1.msra.mxu0 %v354
    %1171 = vmatprep.subr.mxu0 0.0
    %1172 = vmatpush1.msra.mxu0 0.0
    %1173 = vmatprep.subr.mxu0 0.0
    %1174 = vmatpush1.msra.mxu0 0.0
    %1175 = vmatprep.subr.mxu0 0.0
    %1176 = vmatpush1.msra.mxu0 0.0
    %1177 = vmatprep.subr.mxu0 0.0
    %1178 = vmatpush1.msra.mxu0 0.0
    %1179 = vmatprep.subr.mxu0 0.0
    %1180 = vmatpush1.msra.mxu0 0.0
    %1181 = vmatprep.subr.mxu0 0.0
    %1182 = vmatpush1.msra.mxu0 0.0
    %1183 = vmatprep.subr.mxu0 0.0
    %1184 = vmatpush1.msra.mxu0 0.0
    %1185 = vmatprep.subr.mxu0 0.0
    %1186 = vmatpush1.msra.mxu0 0.0
    %1187 = vmatprep.subr.mxu0 0.0
    %1188 = vmatpush1.msra.mxu0 0.0
    %1189 = vmatprep.subr.mxu0 0.0
    %1190 = vmatpush1.msra.mxu0 0.0
    %1191 = vmatprep.subr.mxu0 0.0
    %1192 = vmatpush1.msra.mxu0 0.0
    %1193 = vmatprep.subr.mxu0 0.0
    %1194 = vmatpush1.msra.mxu0 0.0
    %1195 = vmatprep.subr.mxu0 0.0
    %1196 = vmatpush1.msra.mxu0 0.0
    %1197 = vmatprep.subr.mxu0 0.0
    %1198 = vmatpush1.msra.mxu0 0.0
    %1199 = vmatprep.subr.mxu0 0.0
    %1200 = vmatpush1.msra.mxu0 0.0
    %1201 = vmatprep.subr.mxu0 0.0
    %1202 = vmatpush1.msra.mxu0 0.0
    %1203 = vmatprep.mubr.f32.mxu0 0.0
    %1204 = vmatmul.mubr.f32.gmra.mrb[0].mxu0 %v1066
    %v1205 = vpop.f32.mrb[0].mxu0
    %v1206 = vadd.f32 0.0, %v1205
    %v1207 = vpop.f32.mrb[0].mxu0
    %v1208 = vadd.f32 0.0, %v1207
    %1209 = vdwg.mxu0
    %v1214 = vrot.slane %v1135, 4
    %v1215 = vrot.slane %v1137, 4
    %v1216 = vrot.slane %v1206, 4
    %v1217 = vrot.slane %v1208, 4
    %v1222 = vadd.f32 %v217, %v1214
    %v1223 = vadd.f32 %v219, %v1215
    %v1224 = vadd.f32 %v288, %v1216
    %v1225 = vadd.f32 %v290, %v1217
    %v1226 = vmul.f32 %v1222, 0.5
    %v1227 = vtanh.pop %v1226
    %v1228 = vmul.f32 %v1227, 0.5
    %v1229 = vadd.f32 %v1228, 0.5
    %v1230 = vmul.f32 %v1223, 0.5
    %v1231 = vtanh.pop %v1230
    %v1232 = vmul.f32 %v1231, 0.5
    %v1233 = vadd.f32 %v1232, 0.5
    %v1234 = vtanh.pop %v1224
    %v1235 = vmul.f32 %v1225, 0.5
    %v1236 = vtanh.pop %v1235
    %v1237 = vmul.f32 %v1236, 0.5
    %v1238 = vadd.f32 %v1237, 0.5
    %v1240 = vrot.slane %v1062, 7
    %v1242 = vmul.f32 %v1233, %v1240
    %v1243 = vmul.f32 %v1229, %v1234
    %v1244 = vadd.f32 %v1242, %v1243
    %v1245 = vtanh.pop %v1244
    %v1246 = vmul.f32 %v1238, %v1245
    %v1248 = vrot.slane %v1246, 4
    %1250 = vmatprep.subr.mxu0 %v293
    %1251 = vmatpush1.msra.mxu0 %v292
    %1252 = vmatprep.subr.mxu0 %v297
    %1253 = vmatpush1.msra.mxu0 %v296
    %1254 = vmatprep.subr.mxu0 %v301
    %1255 = vmatpush1.msra.mxu0 %v300
    %1256 = vmatprep.subr.mxu0 %v305
    %1257 = vmatpush1.msra.mxu0 %v304
    %1258 = vmatprep.subr.mxu0 %v309
    %1259 = vmatpush1.msra.mxu0 %v308
    %1260 = vmatprep.subr.mxu0 %v313
    %1261 = vmatpush1.msra.mxu0 %v312
    %1262 = vmatprep.subr.mxu0 %v317
    %1263 = vmatpush1.msra.mxu0 %v316
    %1264 = vmatprep.subr.mxu0 %v321
    %1265 = vmatpush1.msra.mxu0 %v320
    %1266 = vmatprep.subr.mxu0 %v325
    %1267 = vmatpush1.msra.mxu0 %v324
    %1268 = vmatprep.subr.mxu0 %v329
    %1269 = vmatpush1.msra.mxu0 %v328
    %1270 = vmatprep.subr.mxu0 %v333
    %1271 = vmatpush1.msra.mxu0 %v332
    %1272 = vmatprep.subr.mxu0 %v337
    %1273 = vmatpush1.msra.mxu0 %v336
    %1274 = vmatprep.subr.mxu0 %v341
    %1275 = vmatpush1.msra.mxu0 %v340
    %1276 = vmatprep.subr.mxu0 %v345
    %1277 = vmatpush1.msra.mxu0 %v344
    %1278 = vmatprep.subr.mxu0 %v349
    %1279 = vmatpush1.msra.mxu0 %v348
    %1280 = vmatprep.subr.mxu0 %v353
    %1281 = vmatpush1.msra.mxu0 %v352
    %1282 = vmatprep.subr.mxu0 0.0
    %1283 = vmatpush1.msra.mxu0 0.0
    %1284 = vmatprep.subr.mxu0 0.0
    %1285 = vmatpush1.msra.mxu0 0.0
    %1286 = vmatprep.subr.mxu0 0.0
    %1287 = vmatpush1.msra.mxu0 0.0
    %1288 = vmatprep.subr.mxu0 0.0
    %1289 = vmatpush1.msra.mxu0 0.0
    %1290 = vmatprep.subr.mxu0 0.0
    %1291 = vmatpush1.msra.mxu0 0.0
    %1292 = vmatprep.subr.mxu0 0.0
    %1293 = vmatpush1.msra.mxu0 0.0
    %1294 = vmatprep.subr.mxu0 0.0
    %1295 = vmatpush1.msra.mxu0 0.0
    %1296 = vmatprep.subr.mxu0 0.0
    %1297 = vmatpush1.msra.mxu0 0.0
    %1298 = vmatprep.subr.mxu0 0.0
    %1299 = vmatpush1.msra.mxu0 0.0
    %1300 = vmatprep.subr.mxu0 0.0
    %1301 = vmatpush1.msra.mxu0 0.0
    %1302 = vmatprep.subr.mxu0 0.0
    %1303 = vmatpush1.msra.mxu0 0.0
    %1304 = vmatprep.subr.mxu0 0.0
    %1305 = vmatpush1.msra.mxu0 0.0
    %1306 = vmatprep.subr.mxu0 0.0
    %1307 = vmatpush1.msra.mxu0 0.0
    %1308 = vmatprep.subr.mxu0 0.0
    %1309 = vmatpush1.msra.mxu0 0.0
    %1310 = vmatprep.subr.mxu0 0.0
    %1311 = vmatpush1.msra.mxu0 0.0
    %1312 = vmatprep.subr.mxu0 0.0
    %1313 = vmatpush1.msra.mxu0 0.0
    %1314 = vmatprep.mubr.f32.mxu0 0.0
    %1315 = vmatmul.mubr.f32.gmra.mrb[0].mxu0 %v1248
    %v1316 = vpop.f32.mrb[0].mxu0
    %v1317 = vadd.f32 0.0, %v1316
    %v1318 = vpop.f32.mrb[0].mxu0
    %v1319 = vadd.f32 0.0, %v1318
    %1320 = vdwg.mxu0
    %1321 = vmatprep.subr.mxu0 %v295
    %1322 = vmatpush1.msra.mxu0 %v294
    %1323 = vmatprep.subr.mxu0 %v299
    %1324 = vmatpush1.msra.mxu0 %v298
    %1325 = vmatprep.subr.mxu0 %v303
    %1326 = vmatpush1.msra.mxu0 %v302
    %1327 = vmatprep.subr.mxu0 %v307
    %1328 = vmatpush1.msra.mxu0 %v306
    %1329 = vmatprep.subr.mxu0 %v311
    %1330 = vmatpush1.msra.mxu0 %v310
    %1331 = vmatprep.subr.mxu0 %v315
    %1332 = vmatpush1.msra.mxu0 %v314
    %1333 = vmatprep.subr.mxu0 %v319
    %1334 = vmatpush1.msra.mxu0 %v318
    %1335 = vmatprep.subr.mxu0 %v323
    %1336 = vmatpush1.msra.mxu0 %v322
    %1337 = vmatprep.subr.mxu0 %v327
    %1338 = vmatpush1.msra.mxu0 %v326
    %1339 = vmatprep.subr.mxu0 %v331
    %1340 = vmatpush1.msra.mxu0 %v330
    %1341 = vmatprep.subr.mxu0 %v335
    %1342 = vmatpush1.msra.mxu0 %v334
    %1343 = vmatprep.subr.mxu0 %v339
    %1344 = vmatpush1.msra.mxu0 %v338
    %1345 = vmatprep.subr.mxu0 %v343
    %1346 = vmatpush1.msra.mxu0 %v342
    %1347 = vmatprep.subr.mxu0 %v347
    %1348 = vmatpush1.msra.mxu0 %v346
    %1349 = vmatprep.subr.mxu0 %v351
    %1350 = vmatpush1.msra.mxu0 %v350
    %1351 = vmatprep.subr.mxu0 %v355
    %1352 = vmatpush1.msra.mxu0 %v354
    %1353 = vmatprep.subr.mxu0 0.0
    %1354 = vmatpush1.msra.mxu0 0.0
    %1355 = vmatprep.subr.mxu0 0.0
    %1356 = vmatpush1.msra.mxu0 0.0
    %1357 = vmatprep.subr.mxu0 0.0
    %1358 = vmatpush1.msra.mxu0 0.0
    %1359 = vmatprep.subr.mxu0 0.0
    %1360 = vmatpush1.msra.mxu0 0.0
    %1361 = vmatprep.subr.mxu0 0.0
    %1362 = vmatpush1.msra.mxu0 0.0
    %1363 = vmatprep.subr.mxu0 0.0
    %1364 = vmatpush1.msra.mxu0 0.0
    %1365 = vmatprep.subr.mxu0 0.0
    %1366 = vmatpush1.msra.mxu0 0.0
    %1367 = vmatprep.subr.mxu0 0.0
    %1368 = vmatpush1.msra.mxu0 0.0
    %1369 = vmatprep.subr.mxu0 0.0
    %1370 = vmatpush1.msra.mxu0 0.0
    %1371 = vmatprep.subr.mxu0 0.0
    %1372 = vmatpush1.msra.mxu0 0.0
    %1373 = vmatprep.subr.mxu0 0.0
    %1374 = vmatpush1.msra.mxu0 0.0
    %1375 = vmatprep.subr.mxu0 0.0
    %1376 = vmatpush1.msra.mxu0 0.0
    %1377 = vmatprep.subr.mxu0 0.0
    %1378 = vmatpush1.msra.mxu0 0.0
    %1379 = vmatprep.subr.mxu0 0.0
    %1380 = vmatpush1.msra.mxu0 0.0
    %1381 = vmatprep.subr.mxu0 0.0
    %1382 = vmatpush1.msra.mxu0 0.0
    %1383 = vmatprep.subr.mxu0 0.0
    %1384 = vmatpush1.msra.mxu0 0.0
    %1385 = vmatprep.mubr.f32.mxu0 0.0
    %1386 = vmatmul.mubr.f32.gmra.mrb[0].mxu0 %v1248
    %v1387 = vpop.f32.mrb[0].mxu0
    %v1388 = vadd.f32 0.0, %v1387
    %v1389 = vpop.f32.mrb[0].mxu0
    %v1390 = vadd.f32 0.0, %v1389
    %1391 = vdwg.mxu0
    %v1396 = vrot.slane %v1317, 3
    %v1397 = vrot.slane %v1319, 3
    %v1398 = vrot.slane %v1388, 3
    %v1399 = vrot.slane %v1390, 3
    %v1404 = vadd.f32 %v217, %v1396
    %v1405 = vadd.f32 %v219, %v1397
    %v1406 = vadd.f32 %v288, %v1398
    %v1407 = vadd.f32 %v290, %v1399
    %v1408 = vmul.f32 %v1404, 0.5
    %v1409 = vtanh.pop %v1408
    %v1410 = vmul.f32 %v1409, 0.5
    %v1411 = vadd.f32 %v1410, 0.5
    %v1412 = vmul.f32 %v1405, 0.5
    %v1413 = vtanh.pop %v1412
    %v1414 = vmul.f32 %v1413, 0.5
    %v1415 = vadd.f32 %v1414, 0.5
    %v1416 = vtanh.pop %v1406
    %v1417 = vmul.f32 %v1407, 0.5
    %v1418 = vtanh.pop %v1417
    %v1419 = vmul.f32 %v1418, 0.5
    %v1420 = vadd.f32 %v1419, 0.5
    %v1422 = vrot.slane %v1244, 7
    %v1424 = vmul.f32 %v1415, %v1422
    %v1425 = vmul.f32 %v1411, %v1416
    %v1426 = vadd.f32 %v1424, %v1425
    %v1427 = vtanh.pop %v1426
    %v1428 = vmul.f32 %v1420, %v1427
    %v1430 = vrot.slane %v1428, 5
    %1432 = vmatprep.subr.mxu0 %v293
    %1433 = vmatpush1.msra.mxu0 %v292
    %1434 = vmatprep.subr.mxu0 %v297
    %1435 = vmatpush1.msra.mxu0 %v296
    %1436 = vmatprep.subr.mxu0 %v301
    %1437 = vmatpush1.msra.mxu0 %v300
    %1438 = vmatprep.subr.mxu0 %v305
    %1439 = vmatpush1.msra.mxu0 %v304
    %1440 = vmatprep.subr.mxu0 %v309
    %1441 = vmatpush1.msra.mxu0 %v308
    %1442 = vmatprep.subr.mxu0 %v313
    %1443 = vmatpush1.msra.mxu0 %v312
    %1444 = vmatprep.subr.mxu0 %v317
    %1445 = vmatpush1.msra.mxu0 %v316
    %1446 = vmatprep.subr.mxu0 %v321
    %1447 = vmatpush1.msra.mxu0 %v320
    %1448 = vmatprep.subr.mxu0 %v325
    %1449 = vmatpush1.msra.mxu0 %v324
    %1450 = vmatprep.subr.mxu0 %v329
    %1451 = vmatpush1.msra.mxu0 %v328
    %1452 = vmatprep.subr.mxu0 %v333
    %1453 = vmatpush1.msra.mxu0 %v332
    %1454 = vmatprep.subr.mxu0 %v337
    %1455 = vmatpush1.msra.mxu0 %v336
    %1456 = vmatprep.subr.mxu0 %v341
    %1457 = vmatpush1.msra.mxu0 %v340
    %1458 = vmatprep.subr.mxu0 %v345
    %1459 = vmatpush1.msra.mxu0 %v344
    %1460 = vmatprep.subr.mxu0 %v349
    %1461 = vmatpush1.msra.mxu0 %v348
    %1462 = vmatprep.subr.mxu0 %v353
    %1463 = vmatpush1.msra.mxu0 %v352
    %1464 = vmatprep.subr.mxu0 0.0
    %1465 = vmatpush1.msra.mxu0 0.0
    %1466 = vmatprep.subr.mxu0 0.0
    %1467 = vmatpush1.msra.mxu0 0.0
    %1468 = vmatprep.subr.mxu0 0.0
    %1469 = vmatpush1.msra.mxu0 0.0
    %1470 = vmatprep.subr.mxu0 0.0
    %1471 = vmatpush1.msra.mxu0 0.0
    %1472 = vmatprep.subr.mxu0 0.0
    %1473 = vmatpush1.msra.mxu0 0.0
    %1474 = vmatprep.subr.mxu0 0.0
    %1475 = vmatpush1.msra.mxu0 0.0
    %1476 = vmatprep.subr.mxu0 0.0
    %1477 = vmatpush1.msra.mxu0 0.0
    %1478 = vmatprep.subr.mxu0 0.0
    %1479 = vmatpush1.msra.mxu0 0.0
    %1480 = vmatprep.subr.mxu0 0.0
    %1481 = vmatpush1.msra.mxu0 0.0
    %1482 = vmatprep.subr.mxu0 0.0
    %1483 = vmatpush1.msra.mxu0 0.0
    %1484 = vmatprep.subr.mxu0 0.0
    %1485 = vmatpush1.msra.mxu0 0.0
    %1486 = vmatprep.subr.mxu0 0.0
    %1487 = vmatpush1.msra.mxu0 0.0
    %1488 = vmatprep.subr.mxu0 0.0
    %1489 = vmatpush1.msra.mxu0 0.0
    %1490 = vmatprep.subr.mxu0 0.0
    %1491 = vmatpush1.msra.mxu0 0.0
    %1492 = vmatprep.subr.mxu0 0.0
    %1493 = vmatpush1.msra.mxu0 0.0
    %1494 = vmatprep.subr.mxu0 0.0
    %1495 = vmatpush1.msra.mxu0 0.0
    %1496 = vmatprep.mubr.f32.mxu0 0.0
    %1497 = vmatmul.mubr.f32.gmra.mrb[0].mxu0 %v1430
    %v1498 = vpop.f32.mrb[0].mxu0
    %v1499 = vadd.f32 0.0, %v1498
    %v1500 = vpop.f32.mrb[0].mxu0
    %v1501 = vadd.f32 0.0, %v1500
    %1502 = vdwg.mxu0
    %1503 = vmatprep.subr.mxu0 %v295
    %1504 = vmatpush1.msra.mxu0 %v294
    %1505 = vmatprep.subr.mxu0 %v299
    %1506 = vmatpush1.msra.mxu0 %v298
    %1507 = vmatprep.subr.mxu0 %v303
    %1508 = vmatpush1.msra.mxu0 %v302
    %1509 = vmatprep.subr.mxu0 %v307
    %1510 = vmatpush1.msra.mxu0 %v306
    %1511 = vmatprep.subr.mxu0 %v311
    %1512 = vmatpush1.msra.mxu0 %v310
    %1513 = vmatprep.subr.mxu0 %v315
    %1514 = vmatpush1.msra.mxu0 %v314
    %1515 = vmatprep.subr.mxu0 %v319
    %1516 = vmatpush1.msra.mxu0 %v318
    %1517 = vmatprep.subr.mxu0 %v323
    %1518 = vmatpush1.msra.mxu0 %v322
    %1519 = vmatprep.subr.mxu0 %v327
    %1520 = vmatpush1.msra.mxu0 %v326
    %1521 = vmatprep.subr.mxu0 %v331
    %1522 = vmatpush1.msra.mxu0 %v330
    %1523 = vmatprep.subr.mxu0 %v335
    %1524 = vmatpush1.msra.mxu0 %v334
    %1525 = vmatprep.subr.mxu0 %v339
    %1526 = vmatpush1.msra.mxu0 %v338
    %1527 = vmatprep.subr.mxu0 %v343
    %1528 = vmatpush1.msra.mxu0 %v342
    %1529 = vmatprep.subr.mxu0 %v347
    %1530 = vmatpush1.msra.mxu0 %v346
    %1531 = vmatprep.subr.mxu0 %v351
    %1532 = vmatpush1.msra.mxu0 %v350
    %1533 = vmatprep.subr.mxu0 %v355
    %1534 = vmatpush1.msra.mxu0 %v354
    %1535 = vmatprep.subr.mxu0 0.0
    %1536 = vmatpush1.msra.mxu0 0.0
    %1537 = vmatprep.subr.mxu0 0.0
    %1538 = vmatpush1.msra.mxu0 0.0
    %1539 = vmatprep.subr.mxu0 0.0
    %1540 = vmatpush1.msra.mxu0 0.0
    %1541 = vmatprep.subr.mxu0 0.0
    %1542 = vmatpush1.msra.mxu0 0.0
    %1543 = vmatprep.subr.mxu0 0.0
    %1544 = vmatpush1.msra.mxu0 0.0
    %1545 = vmatprep.subr.mxu0 0.0
    %1546 = vmatpush1.msra.mxu0 0.0
    %1547 = vmatprep.subr.mxu0 0.0
    %1548 = vmatpush1.msra.mxu0 0.0
    %1549 = vmatprep.subr.mxu0 0.0
    %1550 = vmatpush1.msra.mxu0 0.0
    %1551 = vmatprep.subr.mxu0 0.0
    %1552 = vmatpush1.msra.mxu0 0.0
    %1553 = vmatprep.subr.mxu0 0.0
    %1554 = vmatpush1.msra.mxu0 0.0
    %1555 = vmatprep.subr.mxu0 0.0
    %1556 = vmatpush1.msra.mxu0 0.0
    %1557 = vmatprep.subr.mxu0 0.0
    %1558 = vmatpush1.msra.mxu0 0.0
    %1559 = vmatprep.subr.mxu0 0.0
    %1560 = vmatpush1.msra.mxu0 0.0
    %1561 = vmatprep.subr.mxu0 0.0
    %1562 = vmatpush1.msra.mxu0 0.0
    %1563 = vmatprep.subr.mxu0 0.0
    %1564 = vmatpush1.msra.mxu0 0.0
    %1565 = vmatprep.subr.mxu0 0.0
    %1566 = vmatpush1.msra.mxu0 0.0
    %1567 = vmatprep.mubr.f32.mxu0 0.0
    %1568 = vmatmul.mubr.f32.gmra.mrb[0].mxu0 %v1430
    %v1569 = vpop.f32.mrb[0].mxu0
    %v1570 = vadd.f32 0.0, %v1569
    %v1571 = vpop.f32.mrb[0].mxu0
    %v1572 = vadd.f32 0.0, %v1571
    %1573 = vdwg.mxu0
    %v1578 = vrot.slane %v1499, 2
    %v1579 = vrot.slane %v1501, 2
    %v1580 = vrot.slane %v1570, 2
    %v1581 = vrot.slane %v1572, 2
    %v1586 = vadd.f32 %v217, %v1578
    %v1587 = vadd.f32 %v219, %v1579
    %v1588 = vadd.f32 %v288, %v1580
    %v1589 = vadd.f32 %v290, %v1581
    %v1590 = vmul.f32 %v1586, 0.5
    %v1591 = vtanh.pop %v1590
    %v1592 = vmul.f32 %v1591, 0.5
    %v1593 = vadd.f32 %v1592, 0.5
    %v1594 = vmul.f32 %v1587, 0.5
    %v1595 = vtanh.pop %v1594
    %v1596 = vmul.f32 %v1595, 0.5
    %v1597 = vadd.f32 %v1596, 0.5
    %v1598 = vtanh.pop %v1588
    %v1599 = vmul.f32 %v1589, 0.5
    %v1600 = vtanh.pop %v1599
    %v1601 = vmul.f32 %v1600, 0.5
    %v1602 = vadd.f32 %v1601, 0.5
    %v1604 = vrot.slane %v1426, 7
    %v1606 = vmul.f32 %v1597, %v1604
    %v1607 = vmul.f32 %v1593, %v1598
    %v1608 = vadd.f32 %v1606, %v1607
    %v1609 = vtanh.pop %v1608
    %v1610 = vmul.f32 %v1602, %v1609
    %v1612 = vrot.slane %v1610, 6
    %1614 = vmatprep.subr.mxu0 %v293
    %1615 = vmatpush1.msra.mxu0 %v292
    %1616 = vmatprep.subr.mxu0 %v297
    %1617 = vmatpush1.msra.mxu0 %v296
    %1618 = vmatprep.subr.mxu0 %v301
    %1619 = vmatpush1.msra.mxu0 %v300
    %1620 = vmatprep.subr.mxu0 %v305
    %1621 = vmatpush1.msra.mxu0 %v304
    %1622 = vmatprep.subr.mxu0 %v309
    %1623 = vmatpush1.msra.mxu0 %v308
    %1624 = vmatprep.subr.mxu0 %v313
    %1625 = vmatpush1.msra.mxu0 %v312
    %1626 = vmatprep.subr.mxu0 %v317
    %1627 = vmatpush1.msra.mxu0 %v316
    %1628 = vmatprep.subr.mxu0 %v321
    %1629 = vmatpush1.msra.mxu0 %v320
    %1630 = vmatprep.subr.mxu0 %v325
    %1631 = vmatpush1.msra.mxu0 %v324
    %1632 = vmatprep.subr.mxu0 %v329
    %1633 = vmatpush1.msra.mxu0 %v328
    %1634 = vmatprep.subr.mxu0 %v333
    %1635 = vmatpush1.msra.mxu0 %v332
    %1636 = vmatprep.subr.mxu0 %v337
    %1637 = vmatpush1.msra.mxu0 %v336
    %1638 = vmatprep.subr.mxu0 %v341
    %1639 = vmatpush1.msra.mxu0 %v340
    %1640 = vmatprep.subr.mxu0 %v345
    %1641 = vmatpush1.msra.mxu0 %v344
    %1642 = vmatprep.subr.mxu0 %v349
    %1643 = vmatpush1.msra.mxu0 %v348
    %1644 = vmatprep.subr.mxu0 %v353
    %1645 = vmatpush1.msra.mxu0 %v352
    %1646 = vmatprep.subr.mxu0 0.0
    %1647 = vmatpush1.msra.mxu0 0.0
    %1648 = vmatprep.subr.mxu0 0.0
    %1649 = vmatpush1.msra.mxu0 0.0
    %1650 = vmatprep.subr.mxu0 0.0
    %1651 = vmatpush1.msra.mxu0 0.0
    %1652 = vmatprep.subr.mxu0 0.0
    %1653 = vmatpush1.msra.mxu0 0.0
    %1654 = vmatprep.subr.mxu0 0.0
    %1655 = vmatpush1.msra.mxu0 0.0
    %1656 = vmatprep.subr.mxu0 0.0
    %1657 = vmatpush1.msra.mxu0 0.0
    %1658 = vmatprep.subr.mxu0 0.0
    %1659 = vmatpush1.msra.mxu0 0.0
    %1660 = vmatprep.subr.mxu0 0.0
    %1661 = vmatpush1.msra.mxu0 0.0
    %1662 = vmatprep.subr.mxu0 0.0
    %1663 = vmatpush1.msra.mxu0 0.0
    %1664 = vmatprep.subr.mxu0 0.0
    %1665 = vmatpush1.msra.mxu0 0.0
    %1666 = vmatprep.subr.mxu0 0.0
    %1667 = vmatpush1.msra.mxu0 0.0
    %1668 = vmatprep.subr.mxu0 0.0
    %1669 = vmatpush1.msra.mxu0 0.0
    %1670 = vmatprep.subr.mxu0 0.0
    %1671 = vmatpush1.msra.mxu0 0.0
    %1672 = vmatprep.subr.mxu0 0.0
    %1673 = vmatpush1.msra.mxu0 0.0
    %1674 = vmatprep.subr.mxu0 0.0
    %1675 = vmatpush1.msra.mxu0 0.0
    %1676 = vmatprep.subr.mxu0 0.0
    %1677 = vmatpush1.msra.mxu0 0.0
    %1678 = vmatprep.mubr.f32.mxu0 0.0
    %1679 = vmatmul.mubr.f32.gmra.mrb[0].mxu0 %v1612
    %v1680 = vpop.f32.mrb[0].mxu0
    %v1681 = vadd.f32 0.0, %v1680
    %v1682 = vpop.f32.mrb[0].mxu0
    %v1683 = vadd.f32 0.0, %v1682
    %1684 = vdwg.mxu0
    %1685 = vmatprep.subr.mxu0 %v295
    %1686 = vmatpush1.msra.mxu0 %v294
    %1687 = vmatprep.subr.mxu0 %v299
    %1688 = vmatpush1.msra.mxu0 %v298
    %1689 = vmatprep.subr.mxu0 %v303
    %1690 = vmatpush1.msra.mxu0 %v302
    %1691 = vmatprep.subr.mxu0 %v307
    %1692 = vmatpush1.msra.mxu0 %v306
    %1693 = vmatprep.subr.mxu0 %v311
    %1694 = vmatpush1.msra.mxu0 %v310
    %1695 = vmatprep.subr.mxu0 %v315
    %1696 = vmatpush1.msra.mxu0 %v314
    %1697 = vmatprep.subr.mxu0 %v319
    %1698 = vmatpush1.msra.mxu0 %v318
    %1699 = vmatprep.subr.mxu0 %v323
    %1700 = vmatpush1.msra.mxu0 %v322
    %1701 = vmatprep.subr.mxu0 %v327
    %1702 = vmatpush1.msra.mxu0 %v326
    %1703 = vmatprep.subr.mxu0 %v331
    %1704 = vmatpush1.msra.mxu0 %v330
    %1705 = vmatprep.subr.mxu0 %v335
    %1706 = vmatpush1.msra.mxu0 %v334
    %1707 = vmatprep.subr.mxu0 %v339
    %1708 = vmatpush1.msra.mxu0 %v338
    %1709 = vmatprep.subr.mxu0 %v343
    %1710 = vmatpush1.msra.mxu0 %v342
    %1711 = vmatprep.subr.mxu0 %v347
    %1712 = vmatpush1.msra.mxu0 %v346
    %1713 = vmatprep.subr.mxu0 %v351
    %1714 = vmatpush1.msra.mxu0 %v350
    %1715 = vmatprep.subr.mxu0 %v355
    %1716 = vmatpush1.msra.mxu0 %v354
    %1717 = vmatprep.subr.mxu0 0.0
    %1718 = vmatpush1.msra.mxu0 0.0
    %1719 = vmatprep.subr.mxu0 0.0
    %1720 = vmatpush1.msra.mxu0 0.0
    %1721 = vmatprep.subr.mxu0 0.0
    %1722 = vmatpush1.msra.mxu0 0.0
    %1723 = vmatprep.subr.mxu0 0.0
    %1724 = vmatpush1.msra.mxu0 0.0
    %1725 = vmatprep.subr.mxu0 0.0
    %1726 = vmatpush1.msra.mxu0 0.0
    %1727 = vmatprep.subr.mxu0 0.0
    %1728 = vmatpush1.msra.mxu0 0.0
    %1729 = vmatprep.subr.mxu0 0.0
    %1730 = vmatpush1.msra.mxu0 0.0
    %1731 = vmatprep.subr.mxu0 0.0
    %1732 = vmatpush1.msra.mxu0 0.0
    %1733 = vmatprep.subr.mxu0 0.0
    %1734 = vmatpush1.msra.mxu0 0.0
    %1735 = vmatprep.subr.mxu0 0.0
    %1736 = vmatpush1.msra.mxu0 0.0
    %1737 = vmatprep.subr.mxu0 0.0
    %1738 = vmatpush1.msra.mxu0 0.0
    %1739 = vmatprep.subr.mxu0 0.0
    %1740 = vmatpush1.msra.mxu0 0.0
    %1741 = vmatprep.subr.mxu0 0.0
    %1742 = vmatpush1.msra.mxu0 0.0
    %1743 = vmatprep.subr.mxu0 0.0
    %1744 = vmatpush1.msra.mxu0 0.0
    %1745 = vmatprep.subr.mxu0 0.0
    %1746 = vmatpush1.msra.mxu0 0.0
    %1747 = vmatprep.subr.mxu0 0.0
    %1748 = vmatpush1.msra.mxu0 0.0
    %1749 = vmatprep.mubr.f32.mxu0 0.0
    %1750 = vmatmul.mubr.f32.gmra.mrb[0].mxu0 %v1612
    %v1751 = vpop.f32.mrb[0].mxu0
    %v1752 = vadd.f32 0.0, %v1751
    %v1753 = vpop.f32.mrb[0].mxu0
    %v1754 = vadd.f32 0.0, %v1753
    %1755 = vdwg.mxu0
    %v1760 = vrot.slane %v1681, 1
    %v1761 = vrot.slane %v1683, 1
    %v1762 = vrot.slane %v1752, 1
    %v1763 = vrot.slane %v1754, 1
    %v1768 = vadd.f32 %v217, %v1760
    %v1769 = vadd.f32 %v219, %v1761
    %v1770 = vadd.f32 %v288, %v1762
    %v1771 = vadd.f32 %v290, %v1763
    %v1772 = vmul.f32 %v1768, 0.5
    %v1773 = vtanh.pop %v1772
    %v1774 = vmul.f32 %v1773, 0.5
    %v1775 = vadd.f32 %v1774, 0.5
    %v1776 = vmul.f32 %v1769, 0.5
    %v1777 = vtanh.pop %v1776
    %v1778 = vmul.f32 %v1777, 0.5
    %v1779 = vadd.f32 %v1778, 0.5
    %v1780 = vtanh.pop %v1770
    %v1781 = vmul.f32 %v1771, 0.5
    %v1782 = vtanh.pop %v1781
    %v1783 = vmul.f32 %v1782, 0.5
    %v1784 = vadd.f32 %v1783, 0.5
    %v1786 = vrot.slane %v1608, 7
    %v1788 = vmul.f32 %v1779, %v1786
    %v1789 = vmul.f32 %v1775, %v1780
    %v1790 = vadd.f32 %v1788, %v1789
    %v1791 = vtanh.pop %v1790
    %v1792 = vmul.f32 %v1784, %v1791
    %vm1793 = vcmask 1040384
    %v1794 = vsel %vm1793, %v521, %v700
    %vm1795 = vcmask 1041408
    %v1796 = vsel %vm1795, %v1794, %v882
    %vm1797 = vcmask 1042432
    %v1798 = vsel %vm1797, %v1796, %v1064
    %vm1799 = vcmask 1043456
    %v1800 = vsel %vm1799, %v1798, %v1246
    %vm1801 = vcmask 1044480
    %v1802 = vsel %vm1801, %v1800, %v1428
    %vm1803 = vcmask 1045504
    %v1804 = vsel %vm1803, %v1802, %v1610
    %vm1805 = vcmask 1046528
    %v1806 = vsel %vm1805, %v1804, %v1792
    %v1807 = vpack.c.bf16 %v1806, %v1806
    %1808 = vst [vmem:[#allocation10] sm:$0xf] %v1807
    %1809 = vst [vmem:[#allocation2 - $0x7] sm:$0x80] %v1792
    %1810 = vst [vmem:[#allocation3 - $0x7] sm:$0x80] %v1790
    // Predicated region
    $region34: #{tpu_custom_call.1} parent=1 // pred_check
      _
    $region35: #{tpu_custom_call.1} parent=1 // pred_check_branch
      %1812 = sbr.rel (0) target = $region37
    $region36: #{tpu_custom_call.1} parent=1 // pred_region
      %s1814 = ssub.s32 64, 64
      %1815 = vsyncadd [#allocation6], %s1814
      %s1817 = sshll.u32 [#allocation10], 4
      %s1818 = int_to_ptr.vmem [resolvable:$true] %s1817
      %1820 = dma.vmem_to_hbm [thread:$0]  %s1818, 64, %s4, [#allocation6]
    $region37: #{tpu_custom_call.1} parent=1 // pred_fallthru
      _
    // Predicated region
    $region38: #{tpu_custom_call.1} parent=1 // pred_check
      _
    $region39: #{tpu_custom_call.1} parent=1 // pred_check_branch
      %1822 = sbr.rel (0) target = $region41
    $region40: #{tpu_custom_call.1} parent=1 // pred_region
      %1823 = dma.done [#allocation6], 64
    $region41: #{tpu_custom_call.1} parent=1 // pred_fallthru
      _
    %1824 = vsyncpa [#allocation5], 1
    %1825 = vsyncpa [#allocation8], 1
    %1826 = vsyncpa [#allocation6], 1

</llo_original>
